<compile_context>
chip_gen: v7x
topology: tpu7x:2x2x1
jax: 0.10.0
libtpu: 0.0.40
codegen_flags: <defaults>
</compile_context>

<pallas_src>
import functools

import numpy as np
import jax
import jax.numpy as jnp
from jax.experimental import pallas as pl
from jax.experimental.pallas import tpu as pltpu


def _bn_relu_conv_kernel(x_ref, scale_ref, shift_ref, w_ref, o_ref,
                         pad_ref, col_ref, *, H, W, C, out_scale):
    """BN (pre-folded scale/shift) + ReLU + 3x3 conv (pad=1) for one image.

    x_ref:     (C, H*W)      f32   input image, channels x flattened spatial
    scale_ref: (C, 1)        f32   gamma / sqrt(var + eps)
    shift_ref: (C, 1)        f32   beta - mean * scale
    w_ref:     (C, 9*C)      bf16  conv weight, columns ordered (dy, dx, in_c)
    o_ref:     (C, H*W)      f32   output (lane axis = H*W, lane-dense)
    pad_ref:   (C, H+2, W+2) bf16  scratch: zero-padded activation
    col_ref:   (9*C, H*W)    bf16  scratch: im2col matrix
    """
    HW = H * W
    c_all = pl.ds(0, C)

    # BatchNorm (affine pre-folded) + ReLU in f32, then bf16 for the MXU.
    x = x_ref[...]                                        # (C, H*W) f32
    a = jnp.maximum(x * scale_ref[...] + shift_ref[...], 0.0)
    a = a.astype(jnp.bfloat16)

    # Zero only the 1-pixel halo border; the interior is rewritten each step.
    zrow = jnp.zeros((C, 1, W + 2), jnp.bfloat16)
    pad_ref[c_all, pl.ds(0, 1), pl.ds(0, W + 2)] = zrow
    pad_ref[c_all, pl.ds(H + 1, 1), pl.ds(0, W + 2)] = zrow
    zcol = jnp.zeros((C, H, 1), jnp.bfloat16)
    pad_ref[c_all, pl.ds(1, H), pl.ds(0, 1)] = zcol
    pad_ref[c_all, pl.ds(1, H), pl.ds(W + 1, 1)] = zcol
    pad_ref[c_all, pl.ds(1, H), pl.ds(1, W)] = a.reshape(C, H, W)

    # im2col: rows ordered (dy, dx, in_channel) to match w_ref's columns.
    for dy in range(3):
        for dx in range(3):
            k = (dy * 3 + dx) * C
            tap = pad_ref[c_all, pl.ds(dy, H), pl.ds(dx, W)]   # (C, H, W)
            col_ref[pl.ds(k, C), :] = tap.reshape(C, HW)

    # One fat MXU call: (C, 9C) @ (9C, H*W) -> (C, H*W), f32 accumulation.
    out = jnp.dot(w_ref[...], col_ref[...],
                  preferred_element_type=jnp.float32)
    if out_scale != 1.0:
        out = out * out_scale       # folded n_convs summation: 2^(n_convs-2)
    o_ref[...] = out.astype(o_ref.dtype)


def dense_block_encoder_fwd(x_nchw, gamma, beta, conv_w_oihw, n_convs, eps=1e-5):
    assert n_convs > 0
    N, C, H, W = x_nchw.shape
    HW = H * W

    x = x_nchw.astype(jnp.float32)
    gamma = gamma.astype(jnp.float32)
    beta = beta.astype(jnp.float32)

    # Training-mode BatchNorm2d batch statistics (biased variance) via plain
    # jnp reductions -- XLA fuses these; no extra Pallas pass over x.
    mean = jnp.mean(x, axis=(0, 2, 3))
    var = jnp.mean(jnp.square(x - mean.reshape(1, C, 1, 1)), axis=(0, 2, 3))
    var = jnp.maximum(var, 0.0)                      # guard tiny negatives
    inv_std = jax.lax.rsqrt(var + eps)
    scale = (gamma * inv_std).reshape(C, 1)
    shift = (beta - mean * gamma * inv_std).reshape(C, 1)

    # Conv weight OIHW -> (O, kh, kw, I) -> (C, 9C); bf16 for the MXU.
    w9 = jnp.transpose(conv_w_oihw.astype(jnp.float32), (0, 2, 3, 1))
    w9 = w9.reshape(C, 9 * C).astype(jnp.bfloat16)

    # The PyTorch forward loop collapses to 2^(n_convs-2) * layer0(x) for
    # n_convs >= 2 (exact power-of-two scale); fold it into the kernel store.
    out_scale = float(2 ** (n_convs - 2)) if n_convs >= 2 else 1.0

    x2 = x.reshape(N, C, HW)                         # lane axis = H*W (dense)

    kernel = functools.partial(_bn_relu_conv_kernel,
                               H=H, W=W, C=C, out_scale=out_scale)
    out2 = pl.pallas_call(
        kernel,
        out_shape=jax.ShapeDtypeStruct((N, C, HW), jnp.float32),
        grid=(N,),
        in_specs=[
            pl.BlockSpec((None, C, HW), lambda n: (n, 0, 0)),
            pl.BlockSpec((C, 1), lambda n: (0, 0)),
            pl.BlockSpec((C, 1), lambda n: (0, 0)),
            pl.BlockSpec((C, 9 * C), lambda n: (0, 0)),
        ],
        out_specs=pl.BlockSpec((None, C, HW), lambda n: (n, 0, 0)),
        scratch_shapes=[
            pltpu.VMEM((C, H + 2, W + 2), jnp.bfloat16),   # padded activation
            pltpu.VMEM((9 * C, HW), jnp.bfloat16),         # im2col buffer
        ],
        compiler_params=pltpu.CompilerParams(
            dimension_semantics=("parallel",),
            vmem_limit_bytes=48 * 1024 * 1024),
    )(x2, scale, shift, w9)

    return out2.reshape(N, C, H, W)


# --------------------------------------------------------------------------- #
# Pure-f32 reference replicating the literal PyTorch forward loop.
# --------------------------------------------------------------------------- #
def reference_fwd(x_nchw, gamma, beta, conv_w_oihw, n_convs, eps=1e-5):
    x = x_nchw.astype(jnp.float32)
    mean = jnp.mean(x, axis=(0, 2, 3), keepdims=True)
    var = jnp.mean(jnp.square(x - mean), axis=(0, 2, 3), keepdims=True)
    a = (x - mean) / jnp.sqrt(var + eps)
    a = a * gamma.reshape(1, -1, 1, 1) + beta.reshape(1, -1, 1, 1)
    a = jnp.maximum(a, 0.0)
    o0 = jax.lax.conv_general_dilated(
        a, conv_w_oihw.astype(jnp.float32), window_strides=(1, 1),
        padding="SAME", dimension_numbers=("NCHW", "OIHW", "NCHW"),
        precision=jax.lax.Precision.HIGHEST)
    outputs = []
    for i in range(n_convs):
        if i > 0:
            nxt = 0
            for no in outputs:
                nxt = nxt + no
            outputs.append(nxt)
        else:
            outputs.append(o0)
    return outputs[-1]


if __name__ == "__main__":
    key = jax.random.PRNGKey(0)
    k1, k2, k3, k4 = jax.random.split(key, 4)

    N, C, H, W = 2, 4, 16, 16
    n_convs = 3

    x = jax.random.normal(k1, (N, C, H, W), jnp.float32)
    # BatchNorm2d params (deterministic, slightly perturbed from default init).
    gamma = jnp.ones((C,), jnp.float32) + 0.1 * jax.random.normal(k2, (C,), jnp.float32)
    beta = 0.1 * jax.random.normal(k3, (C,), jnp.float32)
    # Conv2d weight (out_c, in_c, 3, 3), kaiming-uniform-like scale, no bias.
    bound = 1.0 / np.sqrt(C * 3 * 3)
    conv_w = jax.random.uniform(k4, (C, C, 3, 3), jnp.float32, -bound, bound)

    out = dense_block_encoder_fwd(x, gamma, beta, conv_w, n_convs)
    out = jax.block_until_ready(out)

    ref = reference_fwd(x, gamma, beta, conv_w, n_convs)
    # Kernel feeds bf16 operands to the MXU (f32 accumulation), so compare
    # against the f32 reference at bf16-level tolerance.
    np.testing.assert_allclose(np.asarray(out), np.asarray(ref),
                               rtol=5e-2, atol=5e-2)
    print("KERNEL_OK")
</pallas_src>

<mosaic_0001>
module attributes {stable_mosaic.version = 11 : i64} {
  func.func @_bn_relu_conv_kernel(%arg0: i32, %arg1: memref<1x4x256xf32, #tpu.memory_space<vmem>>, %arg2: memref<4x1xf32, #tpu.memory_space<vmem>>, %arg3: memref<4x1xf32, #tpu.memory_space<vmem>>, %arg4: memref<4x36xbf16, #tpu.memory_space<vmem>>, %arg5: memref<1x4x256xf32, #tpu.memory_space<vmem>>, %arg6: memref<4x18x18xbf16, #tpu.memory_space<vmem>>, %arg7: memref<36x256xbf16, #tpu.memory_space<vmem>>) attributes {dimension_semantics = [#tpu.dimension_semantics<parallel>], iteration_bounds = array<i64: 2>, scalar_prefetch = 0 : i64, scratch_operands = 2 : i64, tpu.core_type = #tpu.core_type<tc>, window_params = [{transform_indices = @transform_0, window_bounds = array<i64: 1, 4, 256>}, {pipeline_mode = #tpu.pipeline_mode<synchronous>, transform_indices = @transform_1, window_bounds = array<i64: 4, 1>}, {pipeline_mode = #tpu.pipeline_mode<synchronous>, transform_indices = @transform_2, window_bounds = array<i64: 4, 1>}, {pipeline_mode = #tpu.pipeline_mode<synchronous>, transform_indices = @transform_3, window_bounds = array<i64: 4, 36>}, {transform_indices = @transform_4, window_bounds = array<i64: 1, 4, 256>}]} {
    %c0 = arith.constant 0 : index
    %c0_0 = arith.constant 0 : index
    %c0_1 = arith.constant 0 : index
    %0 = vector.load %arg1[%c0, %c0_0, %c0_1] : memref<1x4x256xf32, #tpu.memory_space<vmem>>, vector<1x4x256xf32>
    %1 = vector.shape_cast %0 : vector<1x4x256xf32> to vector<4x256xf32>
    %c0_2 = arith.constant 0 : index
    %c0_3 = arith.constant 0 : index
    %2 = vector.load %arg2[%c0_2, %c0_3] : memref<4x1xf32, #tpu.memory_space<vmem>>, vector<4x1xf32>
    %3 = vector.broadcast %2 : vector<4x1xf32> to vector<4x256xf32>
    %4 = arith.mulf %1, %3 : vector<4x256xf32>
    %c0_4 = arith.constant 0 : index
    %c0_5 = arith.constant 0 : index
    %5 = vector.load %arg3[%c0_4, %c0_5] : memref<4x1xf32, #tpu.memory_space<vmem>>, vector<4x1xf32>
    %6 = vector.broadcast %5 : vector<4x1xf32> to vector<4x256xf32>
    %7 = arith.addf %4, %6 : vector<4x256xf32>
    %cst = arith.constant 0.000000e+00 : f32
    %8 = vector.broadcast %cst : f32 to vector<4x256xf32>
    %9 = arith.maximumf %7, %8 : vector<4x256xf32>
    %10 = arith.truncf %9 : vector<4x256xf32> to vector<4x256xbf16>
    %cst_6 = arith.constant 0.000000e+00 : bf16
    %11 = vector.broadcast %cst_6 : bf16 to vector<4x1x18xbf16>
    %c0_7 = arith.constant 0 : index
    %c0_8 = arith.constant 0 : index
    %c0_9 = arith.constant 0 : index
    %12 = vector.load %arg6[%c0_7, %c0_8, %c0_9] : memref<4x18x18xbf16, #tpu.memory_space<vmem>>, vector<4x1x18xbf16>
    tpu.vector_store %arg6[%c0_7, %c0_8, %c0_9], %11 {strides = array<i32>} : memref<4x18x18xbf16, #tpu.memory_space<vmem>>, vector<4x1x18xbf16>,
    %c0_10 = arith.constant 0 : index
    %c17 = arith.constant 17 : index
    %c0_11 = arith.constant 0 : index
    %13 = vector.load %arg6[%c0_10, %c17, %c0_11] : memref<4x18x18xbf16, #tpu.memory_space<vmem>>, vector<4x1x18xbf16>
    tpu.vector_store %arg6[%c0_10, %c17, %c0_11], %11 {strides = array<i32>} : memref<4x18x18xbf16, #tpu.memory_space<vmem>>, vector<4x1x18xbf16>,
    %cst_12 = arith.constant 0.000000e+00 : bf16
    %14 = vector.broadcast %cst_12 : bf16 to vector<4x16x1xbf16>
    %c0_13 = arith.constant 0 : index
    %c1 = arith.constant 1 : index
    %c0_14 = arith.constant 0 : index
    %15 = vector.load %arg6[%c0_13, %c1, %c0_14] : memref<4x18x18xbf16, #tpu.memory_space<vmem>>, vector<4x16x1xbf16>
    tpu.vector_store %arg6[%c0_13, %c1, %c0_14], %14 {strides = array<i32>} : memref<4x18x18xbf16, #tpu.memory_space<vmem>>, vector<4x16x1xbf16>,
    %c0_15 = arith.constant 0 : index
    %c1_16 = arith.constant 1 : index
    %c17_17 = arith.constant 17 : index
    %16 = vector.load %arg6[%c0_15, %c1_16, %c17_17] : memref<4x18x18xbf16, #tpu.memory_space<vmem>>, vector<4x16x1xbf16>
    tpu.vector_store %arg6[%c0_15, %c1_16, %c17_17], %14 {strides = array<i32>} : memref<4x18x18xbf16, #tpu.memory_space<vmem>>, vector<4x16x1xbf16>,
    %17 = vector.shape_cast %10 : vector<4x256xbf16> to vector<4x16x16xbf16>
    %c0_18 = arith.constant 0 : index
    %c1_19 = arith.constant 1 : index
    %c1_20 = arith.constant 1 : index
    %18 = vector.load %arg6[%c0_18, %c1_19, %c1_20] : memref<4x18x18xbf16, #tpu.memory_space<vmem>>, vector<4x16x16xbf16>
    tpu.vector_store %arg6[%c0_18, %c1_19, %c1_20], %17 {strides = array<i32>} : memref<4x18x18xbf16, #tpu.memory_space<vmem>>, vector<4x16x16xbf16>,
    %c0_21 = arith.constant 0 : index
    %c0_22 = arith.constant 0 : index
    %c0_23 = arith.constant 0 : index
    %19 = vector.load %arg6[%c0_21, %c0_22, %c0_23] : memref<4x18x18xbf16, #tpu.memory_space<vmem>>, vector<4x16x16xbf16>
    %20 = vector.shape_cast %19 : vector<4x16x16xbf16> to vector<4x256xbf16>
    %c0_24 = arith.constant 0 : index
    %c0_25 = arith.constant 0 : index
    %21 = vector.load %arg7[%c0_24, %c0_25] : memref<36x256xbf16, #tpu.memory_space<vmem>>, vector<4x256xbf16>
    tpu.vector_store %arg7[%c0_24, %c0_25], %20 {strides = array<i32>} : memref<36x256xbf16, #tpu.memory_space<vmem>>, vector<4x256xbf16>,
    %c0_26 = arith.constant 0 : index
    %c0_27 = arith.constant 0 : index
    %c1_28 = arith.constant 1 : index
    %22 = vector.load %arg6[%c0_26, %c0_27, %c1_28] : memref<4x18x18xbf16, #tpu.memory_space<vmem>>, vector<4x16x16xbf16>
    %23 = vector.shape_cast %22 : vector<4x16x16xbf16> to vector<4x256xbf16>
    %c4 = arith.constant 4 : index
    %c0_29 = arith.constant 0 : index
    %24 = vector.load %arg7[%c4, %c0_29] : memref<36x256xbf16, #tpu.memory_space<vmem>>, vector<4x256xbf16>
    tpu.vector_store %arg7[%c4, %c0_29], %23 {strides = array<i32>} : memref<36x256xbf16, #tpu.memory_space<vmem>>, vector<4x256xbf16>,
    %c0_30 = arith.constant 0 : index
    %c0_31 = arith.constant 0 : index
    %c2 = arith.constant 2 : index
    %25 = vector.load %arg6[%c0_30, %c0_31, %c2] : memref<4x18x18xbf16, #tpu.memory_space<vmem>>, vector<4x16x16xbf16>
    %26 = vector.shape_cast %25 : vector<4x16x16xbf16> to vector<4x256xbf16>
    %c8 = arith.constant 8 : index
    %c0_32 = arith.constant 0 : index
    %27 = vector.load %arg7[%c8, %c0_32] : memref<36x256xbf16, #tpu.memory_space<vmem>>, vector<4x256xbf16>
    tpu.vector_store %arg7[%c8, %c0_32], %26 {strides = array<i32>} : memref<36x256xbf16, #tpu.memory_space<vmem>>, vector<4x256xbf16>,
    %c0_33 = arith.constant 0 : index
    %c1_34 = arith.constant 1 : index
    %c0_35 = arith.constant 0 : index
    %28 = vector.load %arg6[%c0_33, %c1_34, %c0_35] : memref<4x18x18xbf16, #tpu.memory_space<vmem>>, vector<4x16x16xbf16>
    %29 = vector.shape_cast %28 : vector<4x16x16xbf16> to vector<4x256xbf16>
    %c12 = arith.constant 12 : index
    %c0_36 = arith.constant 0 : index
    %30 = vector.load %arg7[%c12, %c0_36] : memref<36x256xbf16, #tpu.memory_space<vmem>>, vector<4x256xbf16>
    tpu.vector_store %arg7[%c12, %c0_36], %29 {strides = array<i32>} : memref<36x256xbf16, #tpu.memory_space<vmem>>, vector<4x256xbf16>,
    %c0_37 = arith.constant 0 : index
    %c1_38 = arith.constant 1 : index
    %c1_39 = arith.constant 1 : index
    %31 = vector.load %arg6[%c0_37, %c1_38, %c1_39] : memref<4x18x18xbf16, #tpu.memory_space<vmem>>, vector<4x16x16xbf16>
    %32 = vector.shape_cast %31 : vector<4x16x16xbf16> to vector<4x256xbf16>
    %c16 = arith.constant 16 : index
    %c0_40 = arith.constant 0 : index
    %33 = vector.load %arg7[%c16, %c0_40] : memref<36x256xbf16, #tpu.memory_space<vmem>>, vector<4x256xbf16>
    tpu.vector_store %arg7[%c16, %c0_40], %32 {strides = array<i32>} : memref<36x256xbf16, #tpu.memory_space<vmem>>, vector<4x256xbf16>,
    %c0_41 = arith.constant 0 : index
    %c1_42 = arith.constant 1 : index
    %c2_43 = arith.constant 2 : index
    %34 = vector.load %arg6[%c0_41, %c1_42, %c2_43] : memref<4x18x18xbf16, #tpu.memory_space<vmem>>, vector<4x16x16xbf16>
    %35 = vector.shape_cast %34 : vector<4x16x16xbf16> to vector<4x256xbf16>
    %c20 = arith.constant 20 : index
    %c0_44 = arith.constant 0 : index
    %36 = vector.load %arg7[%c20, %c0_44] : memref<36x256xbf16, #tpu.memory_space<vmem>>, vector<4x256xbf16>
    tpu.vector_store %arg7[%c20, %c0_44], %35 {strides = array<i32>} : memref<36x256xbf16, #tpu.memory_space<vmem>>, vector<4x256xbf16>,
    %c0_45 = arith.constant 0 : index
    %c2_46 = arith.constant 2 : index
    %c0_47 = arith.constant 0 : index
    %37 = vector.load %arg6[%c0_45, %c2_46, %c0_47] : memref<4x18x18xbf16, #tpu.memory_space<vmem>>, vector<4x16x16xbf16>
    %38 = vector.shape_cast %37 : vector<4x16x16xbf16> to vector<4x256xbf16>
    %c24 = arith.constant 24 : index
    %c0_48 = arith.constant 0 : index
    %39 = vector.load %arg7[%c24, %c0_48] : memref<36x256xbf16, #tpu.memory_space<vmem>>, vector<4x256xbf16>
    tpu.vector_store %arg7[%c24, %c0_48], %38 {strides = array<i32>} : memref<36x256xbf16, #tpu.memory_space<vmem>>, vector<4x256xbf16>,
    %c0_49 = arith.constant 0 : index
    %c2_50 = arith.constant 2 : index
    %c1_51 = arith.constant 1 : index
    %40 = vector.load %arg6[%c0_49, %c2_50, %c1_51] : memref<4x18x18xbf16, #tpu.memory_space<vmem>>, vector<4x16x16xbf16>
    %41 = vector.shape_cast %40 : vector<4x16x16xbf16> to vector<4x256xbf16>
    %c28 = arith.constant 28 : index
    %c0_52 = arith.constant 0 : index
    %42 = vector.load %arg7[%c28, %c0_52] : memref<36x256xbf16, #tpu.memory_space<vmem>>, vector<4x256xbf16>
    tpu.vector_store %arg7[%c28, %c0_52], %41 {strides = array<i32>} : memref<36x256xbf16, #tpu.memory_space<vmem>>, vector<4x256xbf16>,
    %c0_53 = arith.constant 0 : index
    %c2_54 = arith.constant 2 : index
    %c2_55 = arith.constant 2 : index
    %43 = vector.load %arg6[%c0_53, %c2_54, %c2_55] : memref<4x18x18xbf16, #tpu.memory_space<vmem>>, vector<4x16x16xbf16>
    %44 = vector.shape_cast %43 : vector<4x16x16xbf16> to vector<4x256xbf16>
    %c32 = arith.constant 32 : index
    %c0_56 = arith.constant 0 : index
    %45 = vector.load %arg7[%c32, %c0_56] : memref<36x256xbf16, #tpu.memory_space<vmem>>, vector<4x256xbf16>
    tpu.vector_store %arg7[%c32, %c0_56], %44 {strides = array<i32>} : memref<36x256xbf16, #tpu.memory_space<vmem>>, vector<4x256xbf16>,
    %c0_57 = arith.constant 0 : index
    %c0_58 = arith.constant 0 : index
    %46 = vector.load %arg4[%c0_57, %c0_58] : memref<4x36xbf16, #tpu.memory_space<vmem>>, vector<4x36xbf16>
    %c0_59 = arith.constant 0 : index
    %c0_60 = arith.constant 0 : index
    %47 = vector.load %arg7[%c0_59, %c0_60] : memref<36x256xbf16, #tpu.memory_space<vmem>>, vector<36x256xbf16>
    %cst_61 = arith.constant dense<0.000000e+00> : vector<4x256xf32>
    %48 = tpu.matmul %46, %47, %cst_61 {dimension_numbers = #tpu.dot_dimension_numbers<[1], [0], [0], [1], [0, 0, 1, 1], [], []>} : vector<4x36xbf16>, vector<36x256xbf16>, vector<4x256xf32> -> vector<4x256xf32>
    %cst_62 = arith.constant 2.000000e+00 : f32
    %49 = vector.broadcast %cst_62 : f32 to vector<4x256xf32>
    %50 = arith.mulf %48, %49 : vector<4x256xf32>
    %c0_63 = arith.constant 0 : index
    %c0_64 = arith.constant 0 : index
    %c0_65 = arith.constant 0 : index
    %51 = vector.load %arg5[%c0_63, %c0_64, %c0_65] : memref<1x4x256xf32, #tpu.memory_space<vmem>>, vector<1x4x256xf32>
    %52 = vector.shape_cast %51 : vector<1x4x256xf32> to vector<4x256xf32>
    %53 = vector.shape_cast %50 : vector<4x256xf32> to vector<1x4x256xf32>
    tpu.vector_store %arg5[%c0_63, %c0_64, %c0_65], %53 {strides = array<i32>} : memref<1x4x256xf32, #tpu.memory_space<vmem>>, vector<1x4x256xf32>,
    return
  }
  func.func @transform_0(%arg0: i32) -> (i32, i32, i32) {
    %c0_i32 = arith.constant 0 : i32
    %c0_i32_0 = arith.constant 0 : i32
    %c0_i32_1 = arith.constant 0 : i32
    return %arg0, %c0_i32, %c0_i32_0 : i32, i32, i32
  }
  func.func @transform_1(%arg0: i32) -> (i32, i32) {
    %c0_i32 = arith.constant 0 : i32
    %c0_i32_0 = arith.constant 0 : i32
    %c0_i32_1 = arith.constant 0 : i32
    return %c0_i32, %c0_i32_0 : i32, i32
  }
  func.func @transform_2(%arg0: i32) -> (i32, i32) {
    %c0_i32 = arith.constant 0 : i32
    %c0_i32_0 = arith.constant 0 : i32
    %c0_i32_1 = arith.constant 0 : i32
    return %c0_i32, %c0_i32_0 : i32, i32
  }
  func.func @transform_3(%arg0: i32) -> (i32, i32) {
    %c0_i32 = arith.constant 0 : i32
    %c0_i32_0 = arith.constant 0 : i32
    %c0_i32_1 = arith.constant 0 : i32
    return %c0_i32, %c0_i32_0 : i32, i32
  }
  func.func @transform_4(%arg0: i32) -> (i32, i32, i32) {
    %c0_i32 = arith.constant 0 : i32
    %c0_i32_0 = arith.constant 0 : i32
    %c0_i32_1 = arith.constant 0 : i32
    return %arg0, %c0_i32, %c0_i32_0 : i32, i32, i32
  }
}

</mosaic_0001>

<llo_original>
// kernel: tpu_custom_call.1
$region0: #{tpu_custom_call.1}
  #allocation0 [shape = 'u32[]', space=smem, size = 0x4, offset = 0x4, fixed_abs, tag = 'smem constant byte address 0x4 - core index']
  #allocation1 [shape = 'u32[144,128]{1,0:T(1,128)}', space=vmem, size = 0x12000, scoped, tag = 'internal scratch']
  #allocation2 [shape = 'bf16[4,18,18]{2,1,0:T(8,128)(2,1)}', space=vmem, size = 0x6000, scoped, tag = 'scratch operand']
  #allocation3 [shape = 'bf16[36,256]{1,0:T(8,128)(2,1)}', space=vmem, size = 0x5000, scoped, tag = 'scratch operand']
  %s0 = inlined_call_operand.hbm [shape: f32[2,4,256], index: 0, kind: input, shape index: {}]
  %s1 = inlined_call_operand.vmem [shape: f32[4,1], index: 1, kind: input, shape index: {}]
  %s2 = inlined_call_operand.vmem [shape: f32[4,1], index: 2, kind: input, shape index: {}]
  %s3 = inlined_call_operand.vmem [shape: bf16[4,36], index: 3, kind: input, shape index: {}]
  %s4 = inlined_call_operand.hbm [shape: f32[2,4,256], index: 4, kind: output, shape index: {}]
  %s5 = sld [smem:[#allocation0]]
  $region53: #{tpu_custom_call.1} parent=0
    _
  %s7 = ssub.s32 1, %s5
  %s8 = scalar_select 0, %s7, %s5
  $region1: #{tpu_custom_call.1} parent=0
    #allocation4 [shape = 'u8[8192]{0}', space=vmem, size = 0x2000, scoped, tag = 'input window, operand 0']
    #allocation5 [shape = 's32[2]{0}', space=sflag, size = 0x8, scoped, tag = 'scoped memory for tpu_custom_call.1']
    #allocation6 [shape = 's32[2]{0}', space=sflag, size = 0x8, scoped, tag = 'scoped memory for tpu_custom_call.1']
    #allocation7 [shape = 'u8[8192]{0}', space=vmem, size = 0x2000, scoped, tag = 'output window, operand 0']
    %9 = vsyncpa [#allocation5], 0
    %s10 = scalar_lea.sflag [#allocation5], 1
    %11 = vsyncpa %s10, 0
    %12 = vsyncpa [#allocation6], 0
    %s13 = scalar_lea.sflag [#allocation6], 1
    %14 = vsyncpa %s13, 0
    loop: start=0, step=1, limit=4
    $region2: #{tpu_custom_call.1} parent=1 // loop_pre_header
      _
    $region3: #{tpu_custom_call.1} parent=1 // loop_header
      %s16 = sphi 0, %s20
      %p17 = scmp.ge.s32.totalorder %s16, 4
      %s26 = sphi 0, %s28
      %s29 = sphi 0, %s26
      %s30 = sphi 0, %s29
      %s46 = sphi 0, %s30
      %s50 = sphi 0, %s50
      %s52 = sphi 0, %s50
      %s53 = sphi 0, %s52
      %s67 = sphi 0, %s53
      %s71 = sphi 0, %s71
      %s73 = sphi 0, %s71
      %s74 = sphi 0, %s73
      %s88 = sphi 0, %s74
      %s92 = sphi 0, %s92
      %s94 = sphi 0, %s92
      %s95 = sphi 0, %s94
      %s109 = sphi 0, %s95
      %s115 = sphi 0, %s117
      %s118 = sphi 0, %s115
      %s119 = sphi 0, %s118
      %s135 = sphi 0, %s119
    $region4: #{tpu_custom_call.1} parent=1 // loop_header_branch
      %19 = sbr.rel (%p17) target = $region8
    $region5: #{tpu_custom_call.1} parent=1 // loop_body
      %s21 = ssub.s32 %s16, 1
      %s22 = ssub.s32 %s16, 2
      %s23 = sadd.s32 %s16, 1
      %s24 = ssub.s32 %s16, %s23
      %p25 = scmp.eq.s32.totalorder %s24, 0
      %s27 = sadd.s32 %s26, 1
      %s28 = scalar_select %p25, %s26, %s27
      %p31 = pneg %p25
      %p32 = scmp.eq.s32.totalorder %s16, 1
      %p33 = por %p31, %p32
      %p34 = scmp.ne.s32.totalorder %s26, %s29
      %p35 = scmp.eq.s32.totalorder %s16, 0
      %p36 = por %p34, %p35
      %p37 = scmp.ne.s32.totalorder %s26, %s29
      %p38 = scmp.eq.s32.totalorder %s21, 1
      %p39 = por %p37, %p38
      %p40 = scmp.ne.s32.totalorder %s29, %s30
      %p41 = scmp.eq.s32.totalorder %s21, 0
      %p42 = por %p40, %p41
      %p43 = scmp.ne.s32.totalorder %s29, %s30
      %p44 = scmp.eq.s32.totalorder %s22, 1
      %p45 = por %p43, %p44
      %p47 = scmp.ne.s32.totalorder %s30, %s46
      %p48 = scmp.eq.s32.totalorder %s22, 0
      %p49 = por %p47, %p48
      %s51 = sadd.s32 %s50, 1
      %p54 = scmp.eq.s32.totalorder %s16, 1
      %p55 = scmp.ne.s32.totalorder %s50, %s52
      %p56 = scmp.eq.s32.totalorder %s16, 0
      %p57 = por %p55, %p56
      %p58 = scmp.ne.s32.totalorder %s50, %s52
      %p59 = scmp.eq.s32.totalorder %s21, 1
      %p60 = por %p58, %p59
      %p61 = scmp.ne.s32.totalorder %s52, %s53
      %p62 = scmp.eq.s32.totalorder %s21, 0
      %p63 = por %p61, %p62
      %p64 = scmp.ne.s32.totalorder %s52, %s53
      %p65 = scmp.eq.s32.totalorder %s22, 1
      %p66 = por %p64, %p65
      %p68 = scmp.ne.s32.totalorder %s53, %s67
      %p69 = scmp.eq.s32.totalorder %s22, 0
      %p70 = por %p68, %p69
      %s72 = sadd.s32 %s71, 1
      %p75 = scmp.eq.s32.totalorder %s16, 1
      %p76 = scmp.ne.s32.totalorder %s71, %s73
      %p77 = scmp.eq.s32.totalorder %s16, 0
      %p78 = por %p76, %p77
      %p79 = scmp.ne.s32.totalorder %s71, %s73
      %p80 = scmp.eq.s32.totalorder %s21, 1
      %p81 = por %p79, %p80
      %p82 = scmp.ne.s32.totalorder %s73, %s74
      %p83 = scmp.eq.s32.totalorder %s21, 0
      %p84 = por %p82, %p83
      %p85 = scmp.ne.s32.totalorder %s73, %s74
      %p86 = scmp.eq.s32.totalorder %s22, 1
      %p87 = por %p85, %p86
      %p89 = scmp.ne.s32.totalorder %s74, %s88
      %p90 = scmp.eq.s32.totalorder %s22, 0
      %p91 = por %p89, %p90
      %s93 = sadd.s32 %s92, 1
      %p96 = scmp.eq.s32.totalorder %s16, 1
      %p97 = scmp.ne.s32.totalorder %s92, %s94
      %p98 = scmp.eq.s32.totalorder %s16, 0
      %p99 = por %p97, %p98
      %p100 = scmp.ne.s32.totalorder %s92, %s94
      %p101 = scmp.eq.s32.totalorder %s21, 1
      %p102 = por %p100, %p101
      %p103 = scmp.ne.s32.totalorder %s94, %s95
      %p104 = scmp.eq.s32.totalorder %s21, 0
      %p105 = por %p103, %p104
      %p106 = scmp.ne.s32.totalorder %s94, %s95
      %p107 = scmp.eq.s32.totalorder %s22, 1
      %p108 = por %p106, %p107
      %p110 = scmp.ne.s32.totalorder %s95, %s109
      %p111 = scmp.eq.s32.totalorder %s22, 0
      %p112 = por %p110, %p111
      %s113 = ssub.s32 %s16, %s23
      %p114 = scmp.eq.s32.totalorder %s113, 0
      %s116 = sadd.s32 %s115, 1
      %s117 = scalar_select %p114, %s115, %s116
      %p120 = pneg %p114
      %p121 = scmp.eq.s32.totalorder %s16, 1
      %p122 = por %p120, %p121
      %p123 = scmp.ne.s32.totalorder %s115, %s118
      %p124 = scmp.eq.s32.totalorder %s16, 0
      %p125 = por %p123, %p124
      %p126 = scmp.ne.s32.totalorder %s115, %s118
      %p127 = scmp.eq.s32.totalorder %s21, 1
      %p128 = por %p126, %p127
      %p129 = scmp.ne.s32.totalorder %s118, %s119
      %p130 = scmp.eq.s32.totalorder %s21, 0
      %p131 = por %p129, %p130
      %p132 = scmp.ne.s32.totalorder %s118, %s119
      %p133 = scmp.eq.s32.totalorder %s22, 1
      %p134 = por %p132, %p133
      %p136 = scmp.ne.s32.totalorder %s119, %s135
      %p137 = scmp.eq.s32.totalorder %s22, 0
      %p138 = por %p136, %p137
      %p139 = scmp.le.s32.totalorder 1, %s16
      %p140 = scmp.lt.s32.totalorder %s16, 3
      %p141 = pnand %p139, %p140
      %p142 = pneg %p141
      // Predicated region
      $region9: #{tpu_custom_call.1} parent=5 // pred_check
        _
      $region10: #{tpu_custom_call.1} parent=5 // pred_check_branch
        %144 = sbr.rel (%p141) target = $region12
      $region11: #{tpu_custom_call.1} parent=5 // pred_region
        %s145 = ssub.s32 %s16, 1
        // Predicated region
        $region13: #{tpu_custom_call.1} parent=11 // pred_check
          %p146 = pneg %p63
        $region14: #{tpu_custom_call.1} parent=11 // pred_check_branch
          %148 = sbr.rel (%p146) target = $region16
        $region15: #{tpu_custom_call.1} parent=11 // pred_region
          _
        $region16: #{tpu_custom_call.1} parent=11 // pred_fallthru
          _
        // Predicated region
        $region17: #{tpu_custom_call.1} parent=11 // pred_check
          %p149 = pneg %p84
        $region18: #{tpu_custom_call.1} parent=11 // pred_check_branch
          %151 = sbr.rel (%p149) target = $region20
        $region19: #{tpu_custom_call.1} parent=11 // pred_region
          _
        $region20: #{tpu_custom_call.1} parent=11 // pred_fallthru
          _
        // Predicated region
        $region21: #{tpu_custom_call.1} parent=11 // pred_check
          %p152 = pneg %p105
        $region22: #{tpu_custom_call.1} parent=11 // pred_check_branch
          %154 = sbr.rel (%p152) target = $region24
        $region23: #{tpu_custom_call.1} parent=11 // pred_region
          _
        $region24: #{tpu_custom_call.1} parent=11 // pred_fallthru
          _
      $region12: #{tpu_custom_call.1} parent=5 // pred_fallthru
        _
      %p155 = scmp.lt.s32.totalorder %s16, 2
      // Predicated region
      $region25: #{tpu_custom_call.1} parent=5 // pred_check
        %p156 = pneg %p155
      $region26: #{tpu_custom_call.1} parent=5 // pred_check_branch
        %158 = sbr.rel (%p156) target = $region28
      $region27: #{tpu_custom_call.1} parent=5 // pred_region
        // Predicated region
        $region29: #{tpu_custom_call.1} parent=27 // pred_check
          %p159 = pneg %p36
        $region30: #{tpu_custom_call.1} parent=27 // pred_check_branch
          %161 = sbr.rel (%p159) target = $region32
        $region31: #{tpu_custom_call.1} parent=27 // pred_region
          %s162 = sand.u32 %s26, 1
          %s163 = scalar_lea.sflag [#allocation5], %s162
          %s164 = sand.u32 %s26, 1
          %s165 = smul.addr %s164, 8
          %s166 = scalar_lea.vmem [#allocation4], %s165
          %s168 = ssub.s32 128, 128
          %169 = vsyncadd %s163, %s168
          %s170 = smul.addr %s16, 2
          %s171 = smul.addr %s170, 64
          %s172 = scalar_lea.hbm %s0, %s171
          %s174 = sshll.u32 %s166, 4
          %s175 = int_to_ptr.vmem [resolvable:$true] %s174
          %177 = dma.hbm_to_vmem [thread:$0]  %s172, 128, %s175, %s163
        $region32: #{tpu_custom_call.1} parent=27 // pred_fallthru
          _
      $region28: #{tpu_custom_call.1} parent=5 // pred_fallthru
        _
      %p178 = scmp.le.s32.totalorder 1, %s16
      %p179 = scmp.lt.s32.totalorder %s16, 3
      %p180 = pnand %p178, %p179
      %p181 = pneg %p180
      // Predicated region
      $region33: #{tpu_custom_call.1} parent=5 // pred_check
        _
      $region34: #{tpu_custom_call.1} parent=5 // pred_check_branch
        %183 = sbr.rel (%p180) target = $region36
      $region35: #{tpu_custom_call.1} parent=5 // pred_region
        %s184 = ssub.s32 %s16, 1
        %s185 = sand.u32 %s29, 1
        %s186 = scalar_lea.sflag [#allocation5], %s185
        %s187 = sand.u32 %s29, 1
        %s188 = smul.addr %s187, 8
        %s189 = scalar_lea.vmem [#allocation4], %s188
        // Predicated region
        $region37: #{tpu_custom_call.1} parent=35 // pred_check
          %p190 = pneg %p42
        $region38: #{tpu_custom_call.1} parent=35 // pred_check_branch
          %192 = sbr.rel (%p190) target = $region40
        $region39: #{tpu_custom_call.1} parent=35 // pred_region
          %193 = dma.done %s186, 128
        $region40: #{tpu_custom_call.1} parent=35 // pred_fallthru
          _
        %s194 = sand.u32 %s29, 1
        %s195 = scalar_lea.sflag [#allocation5], %s194
        %s196 = sand.u32 %s29, 1
        %s197 = smul.addr %s196, 8
        %s198 = scalar_lea.vmem [#allocation4], %s197
        %p199 = pneg %p42
        %p200 = pneg %p39
        %p201 = pneg %p63
        %p202 = pneg %p60
        %p203 = pneg %p84
        %p204 = pneg %p81
        %p205 = pneg %p105
        %p206 = pneg %p102
        %p207 = pneg %p131
        %p208 = pneg %p128
        %s209 = sand.u32 %s118, 1
        %s210 = scalar_lea.sflag [#allocation6], %s209
        %s211 = sand.u32 %s118, 1
        %s212 = smul.addr %s211, 8
        %s213 = scalar_lea.vmem [#allocation7], %s212
        %v215 = vld [vmem:[%s189] sm:$0xff]
        %v216 = vld [vmem:[%s1] sm:$0xf]
        %218 = vset.pattern.permute.xlu0 0
        %219 = vperm.xlu0 %218, %v216
        %v220 = vpop.permute.xlu0 %219
        %v222 = vunpack.c.l.s4 839922192
        %v223 = vunpack.c.0.s8 %v222
        %v224 = vlaneseq
        %v225 = vshrl.u32 %v224, 7
        %v226 = vsub.s32 %v223, %v225
        %v227 = vrot.slane %v220, %v226
        %v229 = vmul.f32 %v215, %v227
        %v230 = vld [vmem:[%s2] sm:$0xf]
        %232 = vset.pattern.permute.xlu0 0
        %233 = vperm.xlu0 %232, %v230
        %v234 = vpop.permute.xlu0 %233
        %v236 = vunpack.c.l.s4 839922192
        %v237 = vunpack.c.0.s8 %v236
        %v238 = vlaneseq
        %v239 = vshrl.u32 %v238, 7
        %v240 = vsub.s32 %v237, %v239
        %v241 = vrot.slane %v234, %v240
        %v243 = vadd.f32 %v229, %v241
        %v244 = vmax.f32 %v243, 0.0
        %v246 = vcombine.high %v244, %v244
        %v248 = vpack.c.bf16 %v244, %v244
        %v249 = vpack.c.bf16 %v246, %v246
        %vm250 = vcmask 139264
        %vm251 = vsmask.f32 256
        %vm252 = vmand %vm250, %vm251
        %v253 = vld [vmem:[#allocation2] sm:$0x1]
        %v254 = vsel %vm252, 0, %v253
        %255 = vst [vmem:[#allocation2] sm:$0x1] %v254
        %v256 = vld [vmem:[#allocation2 + $0xc] sm:$0x1]
        %v257 = vsel %vm252, 0, %v256
        %258 = vst [vmem:[#allocation2 + $0xc] sm:$0x1] %v257
        %v259 = vld [vmem:[#allocation2 + $0x18] sm:$0x1]
        %v260 = vsel %vm252, 0, %v259
        %261 = vst [vmem:[#allocation2 + $0x18] sm:$0x1] %v260
        %v262 = vld [vmem:[#allocation2 + $0x24] sm:$0x1]
        %v263 = vsel %vm252, 0, %v262
        %264 = vst [vmem:[#allocation2 + $0x24] sm:$0x1] %v263
        %vm265 = vsmask.f32 7938
        %vm266 = vmand %vm250, %vm265
        %v267 = vld [vmem:[#allocation2 + $0x8] sm:$0x1]
        %v268 = vsel %vm266, 0, %v267
        %269 = vst [vmem:[#allocation2 + $0x8] sm:$0x1] %v268
        %v270 = vld [vmem:[#allocation2 + $0x14] sm:$0x1]
        %v271 = vsel %vm266, 0, %v270
        %272 = vst [vmem:[#allocation2 + $0x14] sm:$0x1] %v271
        %v273 = vld [vmem:[#allocation2 + $0x20] sm:$0x1]
        %v274 = vsel %vm266, 0, %v273
        %275 = vst [vmem:[#allocation2 + $0x20] sm:$0x1] %v274
        %v276 = vld [vmem:[#allocation2 + $0x2c] sm:$0x1]
        %v277 = vsel %vm266, 0, %v276
        %278 = vst [vmem:[#allocation2 + $0x2c] sm:$0x1] %v277
        %vm279 = vcmask 3072
        %vm280 = vmand %vm279, %vm265
        %v281 = vld [vmem:[#allocation2] sm:$0xf]
        %v282 = vsel %vm280, 0, %v281
        %283 = vst [vmem:[#allocation2] sm:$0xf] %v282
        %vm284 = vcmask 3072
        %285 = vst.msk [vmem:[#allocation2 + $0x4] sm:$0xf] %vm284, 0
        %vm286 = vcmask 0
        %vm287 = vmand %vm286, %vm251
        %v288 = vld [vmem:[#allocation2 + $0x8] sm:$0x1]
        %v289 = vsel %vm287, 0, %v288
        %290 = vst [vmem:[#allocation2 + $0x8] sm:$0x1] %v289
        %v291 = vld [vmem:[#allocation2 + $0xc] sm:$0xf]
        %v292 = vsel %vm280, 0, %v291
        %293 = vst [vmem:[#allocation2 + $0xc] sm:$0xf] %v292
        %294 = vst.msk [vmem:[#allocation2 + $0x10] sm:$0xf] %vm284, 0
        %v295 = vld [vmem:[#allocation2 + $0x14] sm:$0x1]
        %v296 = vsel %vm287, 0, %v295
        %297 = vst [vmem:[#allocation2 + $0x14] sm:$0x1] %v296
        %v298 = vld [vmem:[#allocation2 + $0x18] sm:$0xf]
        %v299 = vsel %vm280, 0, %v298
        %300 = vst [vmem:[#allocation2 + $0x18] sm:$0xf] %v299
        %301 = vst.msk [vmem:[#allocation2 + $0x1c] sm:$0xf] %vm284, 0
        %v302 = vld [vmem:[#allocation2 + $0x20] sm:$0x1]
        %v303 = vsel %vm287, 0, %v302
        %304 = vst [vmem:[#allocation2 + $0x20] sm:$0x1] %v303
        %v305 = vld [vmem:[#allocation2 + $0x24] sm:$0xf]
        %v306 = vsel %vm280, 0, %v305
        %307 = vst [vmem:[#allocation2 + $0x24] sm:$0xf] %v306
        %308 = vst.msk [vmem:[#allocation2 + $0x28] sm:$0xf] %vm284, 0
        %v309 = vld [vmem:[#allocation2 + $0x2c] sm:$0x1]
        %v310 = vsel %vm287, 0, %v309
        %311 = vst [vmem:[#allocation2 + $0x2c] sm:$0x1] %v310
        %vm312 = vcmask 142472
        %vm313 = vmand %vm312, %vm265
        %v314 = vld [vmem:[#allocation2] sm:$0xf]
        %v315 = vsel %vm313, 0, %v314
        %316 = vst [vmem:[#allocation2] sm:$0xf] %v315
        %vm317 = vcmask 142472
        %318 = vst.msk [vmem:[#allocation2 + $0x4] sm:$0xf] %vm317, 0
        %vm319 = vcmask 139400
        %vm320 = vmand %vm319, %vm251
        %v321 = vld [vmem:[#allocation2 + $0x8] sm:$0x1]
        %v322 = vsel %vm320, 0, %v321
        %323 = vst [vmem:[#allocation2 + $0x8] sm:$0x1] %v322
        %v324 = vld [vmem:[#allocation2 + $0xc] sm:$0xf]
        %v325 = vsel %vm313, 0, %v324
        %326 = vst [vmem:[#allocation2 + $0xc] sm:$0xf] %v325
        %327 = vst.msk [vmem:[#allocation2 + $0x10] sm:$0xf] %vm317, 0
        %v328 = vld [vmem:[#allocation2 + $0x14] sm:$0x1]
        %v329 = vsel %vm320, 0, %v328
        %330 = vst [vmem:[#allocation2 + $0x14] sm:$0x1] %v329
        %v331 = vld [vmem:[#allocation2 + $0x18] sm:$0xf]
        %v332 = vsel %vm313, 0, %v331
        %333 = vst [vmem:[#allocation2 + $0x18] sm:$0xf] %v332
        %334 = vst.msk [vmem:[#allocation2 + $0x1c] sm:$0xf] %vm317, 0
        %v335 = vld [vmem:[#allocation2 + $0x20] sm:$0x1]
        %v336 = vsel %vm320, 0, %v335
        %337 = vst [vmem:[#allocation2 + $0x20] sm:$0x1] %v336
        %v338 = vld [vmem:[#allocation2 + $0x24] sm:$0xf]
        %v339 = vsel %vm313, 0, %v338
        %340 = vst [vmem:[#allocation2 + $0x24] sm:$0xf] %v339
        %341 = vst.msk [vmem:[#allocation2 + $0x28] sm:$0xf] %vm317, 0
        %v342 = vld [vmem:[#allocation2 + $0x2c] sm:$0x1]
        %v343 = vsel %vm320, 0, %v342
        %344 = vst [vmem:[#allocation2 + $0x2c] sm:$0x1] %v343
        %346 = vrot.lane.b32.xlu0 %v248, 112
        %v347 = vpop.permute.xlu0 %346
        %349 = vrot.lane.b32.xlu0 %v248, 96
        %v350 = vpop.permute.xlu0 %349
        %352 = vrot.lane.b32.xlu0 %v248, 80
        %v353 = vpop.permute.xlu0 %352
        %355 = vrot.lane.b32.xlu0 %v248, 64
        %v356 = vpop.permute.xlu0 %355
        %358 = vrot.lane.b32.xlu0 %v248, 48
        %v359 = vpop.permute.xlu0 %358
        %361 = vrot.lane.b32.xlu0 %v248, 32
        %v362 = vpop.permute.xlu0 %361
        %364 = vrot.lane.b32.xlu0 %v248, 16
        %v365 = vpop.permute.xlu0 %364
        %368 = vrot.lane.b32.xlu0 %v249, 112
        %v369 = vpop.permute.xlu0 %368
        %371 = vrot.lane.b32.xlu0 %v249, 96
        %v372 = vpop.permute.xlu0 %371
        %374 = vrot.lane.b32.xlu0 %v249, 80
        %v375 = vpop.permute.xlu0 %374
        %377 = vrot.lane.b32.xlu0 %v249, 64
        %v378 = vpop.permute.xlu0 %377
        %380 = vrot.lane.b32.xlu0 %v249, 48
        %v381 = vpop.permute.xlu0 %380
        %383 = vrot.lane.b32.xlu0 %v249, 32
        %v384 = vpop.permute.xlu0 %383
        %386 = vrot.lane.b32.xlu0 %v249, 16
        %v387 = vpop.permute.xlu0 %386
        %v389 = vcombine.low %v248, %v356
        %v391 = vunpack.c.l.s4 1983009808
        %v392 = vunpack.c.0.s8 %v391
        %v393 = vlaneseq
        %v394 = vshrl.u32 %v393, 7
        %v395 = vsub.s32 %v392, %v394
        %v396 = vrot.slane %v389, %v395
        %v397 = vcombine.low %v350, %v362
        %v399 = vunpack.c.l.s4 1983009808
        %v400 = vunpack.c.0.s8 %v399
        %v401 = vlaneseq
        %v402 = vshrl.u32 %v401, 7
        %v403 = vsub.s32 %v400, %v402
        %v404 = vrot.slane %v397, %v403
        %v405 = vcombine.low %v249, %v378
        %v407 = vunpack.c.l.s4 1983009808
        %v408 = vunpack.c.0.s8 %v407
        %v409 = vlaneseq
        %v410 = vshrl.u32 %v409, 7
        %v411 = vsub.s32 %v408, %v410
        %v412 = vrot.slane %v405, %v411
        %v413 = vcombine.low %v372, %v384
        %v415 = vunpack.c.l.s4 1983009808
        %v416 = vunpack.c.0.s8 %v415
        %v417 = vlaneseq
        %v418 = vshrl.u32 %v417, 7
        %v419 = vsub.s32 %v416, %v418
        %v420 = vrot.slane %v413, %v419
        %v421 = vcombine.low %v396, %v404
        %v423 = vunpack.c.l.s4 1934713408
        %v424 = vunpack.c.0.s8 %v423
        %v425 = vlaneseq
        %v426 = vshrl.u32 %v425, 7
        %v427 = vsub.s32 %v424, %v426
        %v428 = vrot.slane %v421, %v427
        %v429 = vcombine.low %v412, %v420
        %v431 = vunpack.c.l.s4 1934713408
        %v432 = vunpack.c.0.s8 %v431
        %v433 = vlaneseq
        %v434 = vshrl.u32 %v433, 7
        %v435 = vsub.s32 %v432, %v434
        %v436 = vrot.slane %v429, %v435
        %v437 = vcombine.low %v428, %v436
        %v438 = vcombine.high %v428, %v436
        %v439 = vcombine.low %v347, %v359
        %v441 = vunpack.c.l.s4 1983009808
        %v442 = vunpack.c.0.s8 %v441
        %v443 = vlaneseq
        %v444 = vshrl.u32 %v443, 7
        %v445 = vsub.s32 %v442, %v444
        %v446 = vrot.slane %v439, %v445
        %v447 = vcombine.low %v353, %v365
        %v449 = vunpack.c.l.s4 1983009808
        %v450 = vunpack.c.0.s8 %v449
        %v451 = vlaneseq
        %v452 = vshrl.u32 %v451, 7
        %v453 = vsub.s32 %v450, %v452
        %v454 = vrot.slane %v447, %v453
        %v455 = vcombine.low %v369, %v381
        %v457 = vunpack.c.l.s4 1983009808
        %v458 = vunpack.c.0.s8 %v457
        %v459 = vlaneseq
        %v460 = vshrl.u32 %v459, 7
        %v461 = vsub.s32 %v458, %v460
        %v462 = vrot.slane %v455, %v461
        %v463 = vcombine.low %v375, %v387
        %v465 = vunpack.c.l.s4 1983009808
        %v466 = vunpack.c.0.s8 %v465
        %v467 = vlaneseq
        %v468 = vshrl.u32 %v467, 7
        %v469 = vsub.s32 %v466, %v468
        %v470 = vrot.slane %v463, %v469
        %v471 = vcombine.low %v446, %v454
        %v473 = vunpack.c.l.s4 1934713408
        %v474 = vunpack.c.0.s8 %v473
        %v475 = vlaneseq
        %v476 = vshrl.u32 %v475, 7
        %v477 = vsub.s32 %v474, %v476
        %v478 = vrot.slane %v471, %v477
        %v479 = vcombine.low %v462, %v470
        %v481 = vunpack.c.l.s4 1934713408
        %v482 = vunpack.c.0.s8 %v481
        %v483 = vlaneseq
        %v484 = vshrl.u32 %v483, 7
        %v485 = vsub.s32 %v482, %v484
        %v486 = vrot.slane %v479, %v485
        %v487 = vcombine.low %v478, %v486
        %v488 = vcombine.high %v478, %v486
        %v491 = vpack.i.b16 %v487, %v437
        %v492 = vshrl.u32 %v437, 16
        %v493 = vshrl.u32 %v487, 16
        %v494 = vpack.i.b16 %v493, %v492
        %v497 = vpack.i.b16 %v488, %v438
        %v498 = vshrl.u32 %v438, 16
        %v499 = vshrl.u32 %v488, 16
        %v500 = vpack.i.b16 %v499, %v498
        %v501 = vunpack.c.l.b16 %v491
        %v502 = vunpack.c.h.b16 %v491
        %v503 = vunpack.c.l.b16 %v494
        %v504 = vunpack.c.h.b16 %v494
        %v505 = vunpack.c.l.b16 %v497
        %v506 = vunpack.c.h.b16 %v497
        %v507 = vunpack.c.l.b16 %v500
        %v508 = vunpack.c.h.b16 %v500
        %v509 = vpack.c.b16 %v501, %v501
        %v510 = vpack.c.b16 %v502, %v502
        %v511 = vpack.c.b16 %v503, %v503
        %v512 = vpack.c.b16 %v504, %v504
        %v513 = vpack.c.b16 %v505, %v505
        %v514 = vpack.c.b16 %v506, %v506
        %v515 = vpack.c.b16 %v507, %v507
        %v516 = vpack.c.b16 %v508, %v508
        %vm517 = vsmask.f32 4368
        %vm518 = vmor %vm251, %vm517
        %v520 = vshrl.u32 %v509, 16
        %v522 = vrot.slane %v520, 7
        %v523 = vshll.u32 %v509, 16
        %v525 = vor.u32 %v522, %v523
        %v526 = vrot.slane %v522, 4
        %v528 = vshrl.u32 %v510, 16
        %v530 = vrot.slane %v528, 7
        %v531 = vshll.u32 %v510, 16
        %v533 = vor.u32 %v530, %v531
        %v534 = vsel %vm518, %v526, %v533
        %v535 = vrot.slane %v530, 4
        %v537 = vshrl.u32 %v511, 16
        %v539 = vrot.slane %v537, 7
        %v540 = vshll.u32 %v511, 16
        %v542 = vor.u32 %v539, %v540
        %v543 = vrot.slane %v539, 4
        %v545 = vshrl.u32 %v512, 16
        %v547 = vrot.slane %v545, 7
        %v548 = vshll.u32 %v512, 16
        %v550 = vor.u32 %v547, %v548
        %v551 = vsel %vm518, %v543, %v550
        %v552 = vrot.slane %v547, 4
        %v554 = vshrl.u32 %v513, 16
        %v556 = vrot.slane %v554, 7
        %v557 = vshll.u32 %v513, 16
        %v559 = vor.u32 %v556, %v557
        %v560 = vrot.slane %v556, 4
        %v562 = vshrl.u32 %v514, 16
        %v564 = vrot.slane %v562, 7
        %v565 = vshll.u32 %v514, 16
        %v567 = vor.u32 %v564, %v565
        %v568 = vsel %vm518, %v560, %v567
        %v569 = vrot.slane %v564, 4
        %v571 = vshrl.u32 %v515, 16
        %v573 = vrot.slane %v571, 7
        %v574 = vshll.u32 %v515, 16
        %v576 = vor.u32 %v573, %v574
        %v577 = vrot.slane %v573, 4
        %v579 = vshrl.u32 %v516, 16
        %v581 = vrot.slane %v579, 7
        %v582 = vshll.u32 %v516, 16
        %v584 = vor.u32 %v581, %v582
        %v585 = vsel %vm518, %v577, %v584
        %v586 = vrot.slane %v581, 4
        %587 = vrot.lane.b32.xlu0 %v525, 1
        %v588 = vpop.permute.xlu0 %587
        %589 = vrot.lane.b32.xlu0 %v534, 1
        %v590 = vpop.permute.xlu0 %589
        %591 = vrot.lane.b32.xlu0 %v535, 1
        %v592 = vpop.permute.xlu0 %591
        %593 = vrot.lane.b32.xlu0 %v542, 1
        %v594 = vpop.permute.xlu0 %593
        %595 = vrot.lane.b32.xlu0 %v551, 1
        %v596 = vpop.permute.xlu0 %595
        %597 = vrot.lane.b32.xlu0 %v552, 1
        %v598 = vpop.permute.xlu0 %597
        %599 = vrot.lane.b32.xlu0 %v559, 1
        %v600 = vpop.permute.xlu0 %599
        %601 = vrot.lane.b32.xlu0 %v568, 1
        %v602 = vpop.permute.xlu0 %601
        %603 = vrot.lane.b32.xlu0 %v569, 1
        %v604 = vpop.permute.xlu0 %603
        %605 = vrot.lane.b32.xlu0 %v576, 1
        %v606 = vpop.permute.xlu0 %605
        %607 = vrot.lane.b32.xlu0 %v585, 1
        %v608 = vpop.permute.xlu0 %607
        %609 = vrot.lane.b32.xlu0 %v586, 1
        %v610 = vpop.permute.xlu0 %609
        %vm623 = vcmask 134152
        %vm624 = vmand %vm623, %vm265
        %v625 = vld [vmem:[#allocation2] sm:$0xf]
        %v626 = vsel %vm624, %v588, %v625
        %627 = vst [vmem:[#allocation2] sm:$0xf] %v626
        %vm628 = vcmask 134152
        %629 = vst.msk [vmem:[#allocation2 + $0x4] sm:$0xf] %vm628, %v590
        %vm630 = vcmask 131080
        %vm631 = vmand %vm630, %vm251
        %v632 = vld [vmem:[#allocation2 + $0x8] sm:$0x1]
        %v633 = vsel %vm631, %v592, %v632
        %634 = vst [vmem:[#allocation2 + $0x8] sm:$0x1] %v633
        %v635 = vld [vmem:[#allocation2 + $0xc] sm:$0xf]
        %v636 = vsel %vm624, %v594, %v635
        %637 = vst [vmem:[#allocation2 + $0xc] sm:$0xf] %v636
        %638 = vst.msk [vmem:[#allocation2 + $0x10] sm:$0xf] %vm628, %v596
        %v639 = vld [vmem:[#allocation2 + $0x14] sm:$0x1]
        %v640 = vsel %vm631, %v598, %v639
        %641 = vst [vmem:[#allocation2 + $0x14] sm:$0x1] %v640
        %v642 = vld [vmem:[#allocation2 + $0x18] sm:$0xf]
        %v643 = vsel %vm624, %v600, %v642
        %644 = vst [vmem:[#allocation2 + $0x18] sm:$0xf] %v643
        %645 = vst.msk [vmem:[#allocation2 + $0x1c] sm:$0xf] %vm628, %v602
        %v646 = vld [vmem:[#allocation2 + $0x20] sm:$0x1]
        %v647 = vsel %vm631, %v604, %v646
        %648 = vst [vmem:[#allocation2 + $0x20] sm:$0x1] %v647
        %v649 = vld [vmem:[#allocation2 + $0x24] sm:$0xf]
        %v650 = vsel %vm624, %v606, %v649
        %651 = vst [vmem:[#allocation2 + $0x24] sm:$0xf] %v650
        %652 = vst.msk [vmem:[#allocation2 + $0x28] sm:$0xf] %vm628, %v608
        %v653 = vld [vmem:[#allocation2 + $0x2c] sm:$0x1]
        %v654 = vsel %vm631, %v610, %v653
        %655 = vst [vmem:[#allocation2 + $0x2c] sm:$0x1] %v654
        %v656 = vld [vmem:[#allocation2] sm:$0xf]
        %v657 = vld [vmem:[#allocation2 + $0x4] sm:$0xf]
        %v658 = vld [vmem:[#allocation2 + $0xc] sm:$0xf]
        %v659 = vld [vmem:[#allocation2 + $0x10] sm:$0xf]
        %v660 = vld [vmem:[#allocation2 + $0x18] sm:$0xf]
        %v661 = vld [vmem:[#allocation2 + $0x1c] sm:$0xf]
        %v662 = vld [vmem:[#allocation2 + $0x24] sm:$0xf]
        %v663 = vld [vmem:[#allocation2 + $0x28] sm:$0xf]
        %v666 = vpack.i.b16 %v658, %v656
        %v667 = vshrl.u32 %v656, 16
        %v668 = vshrl.u32 %v658, 16
        %v669 = vpack.i.b16 %v668, %v667
        %v672 = vpack.i.b16 %v662, %v660
        %v673 = vshrl.u32 %v660, 16
        %v674 = vshrl.u32 %v662, 16
        %v675 = vpack.i.b16 %v674, %v673
        %v678 = vpack.i.b16 %v659, %v657
        %v679 = vshrl.u32 %v657, 16
        %v680 = vshrl.u32 %v659, 16
        %v681 = vpack.i.b16 %v680, %v679
        %v684 = vpack.i.b16 %v663, %v661
        %v685 = vshrl.u32 %v661, 16
        %v686 = vshrl.u32 %v663, 16
        %v687 = vpack.i.b16 %v686, %v685
        %v690 = vunpack.c.l.s4 1983009808
        %v691 = vunpack.c.0.s8 %v690
        %v692 = vlaneseq
        %v693 = vshrl.u32 %v692, 7
        %v694 = vsub.s32 %v691, %v693
        %v695 = vrot.slane %v666, %v694
        %v698 = vunpack.c.l.s4 1983009808
        %v699 = vunpack.c.0.s8 %v698
        %v700 = vlaneseq
        %v701 = vshrl.u32 %v700, 7
        %v702 = vsub.s32 %v699, %v701
        %v703 = vrot.slane %v672, %v702
        %v704 = vcombine.low %v695, %v703
        %v705 = vcombine.high %v695, %v703
        %v707 = vunpack.c.l.s4 1934713408
        %v708 = vunpack.c.0.s8 %v707
        %v709 = vlaneseq
        %v710 = vshrl.u32 %v709, 7
        %v711 = vsub.s32 %v708, %v710
        %v712 = vrot.slane %v704, %v711
        %v714 = vunpack.c.l.s4 1934713408
        %v715 = vunpack.c.0.s8 %v714
        %v716 = vlaneseq
        %v717 = vshrl.u32 %v716, 7
        %v718 = vsub.s32 %v715, %v717
        %v719 = vrot.slane %v705, %v718
        %v720 = vcombine.high %v712, 0
        %v721 = vcombine.high %v719, 0
        %v724 = vunpack.c.l.s4 1983009808
        %v725 = vunpack.c.0.s8 %v724
        %v726 = vlaneseq
        %v727 = vshrl.u32 %v726, 7
        %v728 = vsub.s32 %v725, %v727
        %v729 = vrot.slane %v669, %v728
        %v732 = vunpack.c.l.s4 1983009808
        %v733 = vunpack.c.0.s8 %v732
        %v734 = vlaneseq
        %v735 = vshrl.u32 %v734, 7
        %v736 = vsub.s32 %v733, %v735
        %v737 = vrot.slane %v675, %v736
        %v738 = vcombine.low %v729, %v737
        %v739 = vcombine.high %v729, %v737
        %v741 = vunpack.c.l.s4 1934713408
        %v742 = vunpack.c.0.s8 %v741
        %v743 = vlaneseq
        %v744 = vshrl.u32 %v743, 7
        %v745 = vsub.s32 %v742, %v744
        %v746 = vrot.slane %v738, %v745
        %v748 = vunpack.c.l.s4 1934713408
        %v749 = vunpack.c.0.s8 %v748
        %v750 = vlaneseq
        %v751 = vshrl.u32 %v750, 7
        %v752 = vsub.s32 %v749, %v751
        %v753 = vrot.slane %v739, %v752
        %v754 = vcombine.high %v746, 0
        %v755 = vcombine.high %v753, 0
        %v758 = vunpack.c.l.s4 1983009808
        %v759 = vunpack.c.0.s8 %v758
        %v760 = vlaneseq
        %v761 = vshrl.u32 %v760, 7
        %v762 = vsub.s32 %v759, %v761
        %v763 = vrot.slane %v678, %v762
        %v766 = vunpack.c.l.s4 1983009808
        %v767 = vunpack.c.0.s8 %v766
        %v768 = vlaneseq
        %v769 = vshrl.u32 %v768, 7
        %v770 = vsub.s32 %v767, %v769
        %v771 = vrot.slane %v684, %v770
        %v772 = vcombine.low %v763, %v771
        %v773 = vcombine.high %v763, %v771
        %v775 = vunpack.c.l.s4 1934713408
        %v776 = vunpack.c.0.s8 %v775
        %v777 = vlaneseq
        %v778 = vshrl.u32 %v777, 7
        %v779 = vsub.s32 %v776, %v778
        %v780 = vrot.slane %v772, %v779
        %v782 = vunpack.c.l.s4 1934713408
        %v783 = vunpack.c.0.s8 %v782
        %v784 = vlaneseq
        %v785 = vshrl.u32 %v784, 7
        %v786 = vsub.s32 %v783, %v785
        %v787 = vrot.slane %v773, %v786
        %v788 = vcombine.high %v780, 0
        %v789 = vcombine.high %v787, 0
        %v792 = vunpack.c.l.s4 1983009808
        %v793 = vunpack.c.0.s8 %v792
        %v794 = vlaneseq
        %v795 = vshrl.u32 %v794, 7
        %v796 = vsub.s32 %v793, %v795
        %v797 = vrot.slane %v681, %v796
        %v800 = vunpack.c.l.s4 1983009808
        %v801 = vunpack.c.0.s8 %v800
        %v802 = vlaneseq
        %v803 = vshrl.u32 %v802, 7
        %v804 = vsub.s32 %v801, %v803
        %v805 = vrot.slane %v687, %v804
        %v806 = vcombine.low %v797, %v805
        %v807 = vcombine.high %v797, %v805
        %v809 = vunpack.c.l.s4 1934713408
        %v810 = vunpack.c.0.s8 %v809
        %v811 = vlaneseq
        %v812 = vshrl.u32 %v811, 7
        %v813 = vsub.s32 %v810, %v812
        %v814 = vrot.slane %v806, %v813
        %v816 = vunpack.c.l.s4 1934713408
        %v817 = vunpack.c.0.s8 %v816
        %v818 = vlaneseq
        %v819 = vshrl.u32 %v818, 7
        %v820 = vsub.s32 %v817, %v819
        %v821 = vrot.slane %v807, %v820
        %v822 = vcombine.high %v814, 0
        %v823 = vcombine.high %v821, 0
        %v825 = vunpack.c.l.b16 %v746
        %v826 = vpack.c.b16 %v825, %v825
        %827 = vrot.lane.b32.xlu0 %v826, 16
        %v828 = vpop.permute.xlu0 %827
        %v830 = vunpack.c.l.b16 %v720
        %v831 = vpack.c.b16 %v830, %v830
        %832 = vrot.lane.b32.xlu0 %v831, 32
        %v833 = vpop.permute.xlu0 %832
        %v835 = vunpack.c.l.b16 %v754
        %v836 = vpack.c.b16 %v835, %v835
        %837 = vrot.lane.b32.xlu0 %v836, 48
        %v838 = vpop.permute.xlu0 %837
        %v840 = vunpack.c.l.b16 %v719
        %v841 = vpack.c.b16 %v840, %v840
        %842 = vrot.lane.b32.xlu0 %v841, 64
        %v843 = vpop.permute.xlu0 %842
        %v845 = vunpack.c.l.b16 %v753
        %v846 = vpack.c.b16 %v845, %v845
        %847 = vrot.lane.b32.xlu0 %v846, 80
        %v848 = vpop.permute.xlu0 %847
        %v850 = vunpack.c.l.b16 %v721
        %v851 = vpack.c.b16 %v850, %v850
        %852 = vrot.lane.b32.xlu0 %v851, 96
        %v853 = vpop.permute.xlu0 %852
        %v855 = vunpack.c.l.b16 %v755
        %v856 = vpack.c.b16 %v855, %v855
        %857 = vrot.lane.b32.xlu0 %v856, 112
        %v858 = vpop.permute.xlu0 %857
        %v860 = vunpack.c.l.b16 %v814
        %v861 = vpack.c.b16 %v860, %v860
        %862 = vrot.lane.b32.xlu0 %v861, 16
        %v863 = vpop.permute.xlu0 %862
        %v865 = vunpack.c.l.b16 %v788
        %v866 = vpack.c.b16 %v865, %v865
        %867 = vrot.lane.b32.xlu0 %v866, 32
        %v868 = vpop.permute.xlu0 %867
        %v870 = vunpack.c.l.b16 %v822
        %v871 = vpack.c.b16 %v870, %v870
        %872 = vrot.lane.b32.xlu0 %v871, 48
        %v873 = vpop.permute.xlu0 %872
        %v875 = vunpack.c.l.b16 %v787
        %v876 = vpack.c.b16 %v875, %v875
        %877 = vrot.lane.b32.xlu0 %v876, 64
        %v878 = vpop.permute.xlu0 %877
        %v880 = vunpack.c.l.b16 %v821
        %v881 = vpack.c.b16 %v880, %v880
        %882 = vrot.lane.b32.xlu0 %v881, 80
        %v883 = vpop.permute.xlu0 %882
        %v885 = vunpack.c.l.b16 %v789
        %v886 = vpack.c.b16 %v885, %v885
        %887 = vrot.lane.b32.xlu0 %v886, 96
        %v888 = vpop.permute.xlu0 %887
        %v890 = vunpack.c.l.b16 %v823
        %v891 = vpack.c.b16 %v890, %v890
        %892 = vrot.lane.b32.xlu0 %v891, 112
        %v893 = vpop.permute.xlu0 %892
        %vm894 = vcmask 130048
        %v897 = vsel %vm894, %v712, %v828
        %vm898 = vcmask 261120
        %v900 = vsel %vm898, %v897, %v833
        %vm901 = vcmask 392192
        %v903 = vsel %vm901, %v900, %v838
        %vm904 = vcmask 523264
        %v906 = vsel %vm904, %v903, %v843
        %vm907 = vcmask 654336
        %v909 = vsel %vm907, %v906, %v848
        %vm910 = vcmask 785408
        %v912 = vsel %vm910, %v909, %v853
        %vm913 = vcmask 916480
        %v915 = vsel %vm913, %v912, %v858
        %v918 = vsel %vm894, %v780, %v863
        %v920 = vsel %vm898, %v918, %v868
        %v922 = vsel %vm901, %v920, %v873
        %v924 = vsel %vm904, %v922, %v878
        %v926 = vsel %vm907, %v924, %v883
        %v928 = vsel %vm910, %v926, %v888
        %v930 = vsel %vm913, %v928, %v893
        %v933 = vunpack.c.l.b16 %v915
        %v934 = vunpack.c.l.b16 %v930
        %v935 = vpack.c.b16 %v934, %v933
        %937 = vst [vmem:[#allocation3] sm:$0x33] %v935
        %v938 = vld [vmem:[#allocation2] sm:$0xf]
        %v939 = vld [vmem:[#allocation2 + $0x4] sm:$0xf]
        %v940 = vld [vmem:[#allocation2 + $0xc] sm:$0xf]
        %v941 = vld [vmem:[#allocation2 + $0x10] sm:$0xf]
        %v942 = vld [vmem:[#allocation2 + $0x18] sm:$0xf]
        %v943 = vld [vmem:[#allocation2 + $0x1c] sm:$0xf]
        %v944 = vld [vmem:[#allocation2 + $0x24] sm:$0xf]
        %v945 = vld [vmem:[#allocation2 + $0x28] sm:$0xf]
        %954 = vrot.lane.b32.xlu0 %v938, 127
        %v955 = vpop.permute.xlu0 %954
        %956 = vrot.lane.b32.xlu0 %v939, 127
        %v957 = vpop.permute.xlu0 %956
        %958 = vrot.lane.b32.xlu0 %v940, 127
        %v959 = vpop.permute.xlu0 %958
        %960 = vrot.lane.b32.xlu0 %v941, 127
        %v961 = vpop.permute.xlu0 %960
        %962 = vrot.lane.b32.xlu0 %v942, 127
        %v963 = vpop.permute.xlu0 %962
        %964 = vrot.lane.b32.xlu0 %v943, 127
        %v965 = vpop.permute.xlu0 %964
        %966 = vrot.lane.b32.xlu0 %v944, 127
        %v967 = vpop.permute.xlu0 %966
        %968 = vrot.lane.b32.xlu0 %v945, 127
        %v969 = vpop.permute.xlu0 %968
        %v972 = vpack.i.b16 %v959, %v955
        %v973 = vshrl.u32 %v955, 16
        %v974 = vshrl.u32 %v959, 16
        %v975 = vpack.i.b16 %v974, %v973
        %v978 = vpack.i.b16 %v967, %v963
        %v979 = vshrl.u32 %v963, 16
        %v980 = vshrl.u32 %v967, 16
        %v981 = vpack.i.b16 %v980, %v979
        %v984 = vpack.i.b16 %v961, %v957
        %v985 = vshrl.u32 %v957, 16
        %v986 = vshrl.u32 %v961, 16
        %v987 = vpack.i.b16 %v986, %v985
        %v990 = vpack.i.b16 %v969, %v965
        %v991 = vshrl.u32 %v965, 16
        %v992 = vshrl.u32 %v969, 16
        %v993 = vpack.i.b16 %v992, %v991
        %v996 = vunpack.c.l.s4 1983009808
        %v997 = vunpack.c.0.s8 %v996
        %v998 = vlaneseq
        %v999 = vshrl.u32 %v998, 7
        %v1000 = vsub.s32 %v997, %v999
        %v1001 = vrot.slane %v972, %v1000
        %v1004 = vunpack.c.l.s4 1983009808
        %v1005 = vunpack.c.0.s8 %v1004
        %v1006 = vlaneseq
        %v1007 = vshrl.u32 %v1006, 7
        %v1008 = vsub.s32 %v1005, %v1007
        %v1009 = vrot.slane %v978, %v1008
        %v1010 = vcombine.low %v1001, %v1009
        %v1011 = vcombine.high %v1001, %v1009
        %v1013 = vunpack.c.l.s4 1934713408
        %v1014 = vunpack.c.0.s8 %v1013
        %v1015 = vlaneseq
        %v1016 = vshrl.u32 %v1015, 7
        %v1017 = vsub.s32 %v1014, %v1016
        %v1018 = vrot.slane %v1010, %v1017
        %v1020 = vunpack.c.l.s4 1934713408
        %v1021 = vunpack.c.0.s8 %v1020
        %v1022 = vlaneseq
        %v1023 = vshrl.u32 %v1022, 7
        %v1024 = vsub.s32 %v1021, %v1023
        %v1025 = vrot.slane %v1011, %v1024
        %v1026 = vcombine.high %v1018, 0
        %v1027 = vcombine.high %v1025, 0
        %v1030 = vunpack.c.l.s4 1983009808
        %v1031 = vunpack.c.0.s8 %v1030
        %v1032 = vlaneseq
        %v1033 = vshrl.u32 %v1032, 7
        %v1034 = vsub.s32 %v1031, %v1033
        %v1035 = vrot.slane %v975, %v1034
        %v1038 = vunpack.c.l.s4 1983009808
        %v1039 = vunpack.c.0.s8 %v1038
        %v1040 = vlaneseq
        %v1041 = vshrl.u32 %v1040, 7
        %v1042 = vsub.s32 %v1039, %v1041
        %v1043 = vrot.slane %v981, %v1042
        %v1044 = vcombine.low %v1035, %v1043
        %v1045 = vcombine.high %v1035, %v1043
        %v1047 = vunpack.c.l.s4 1934713408
        %v1048 = vunpack.c.0.s8 %v1047
        %v1049 = vlaneseq
        %v1050 = vshrl.u32 %v1049, 7
        %v1051 = vsub.s32 %v1048, %v1050
        %v1052 = vrot.slane %v1044, %v1051
        %v1054 = vunpack.c.l.s4 1934713408
        %v1055 = vunpack.c.0.s8 %v1054
        %v1056 = vlaneseq
        %v1057 = vshrl.u32 %v1056, 7
        %v1058 = vsub.s32 %v1055, %v1057
        %v1059 = vrot.slane %v1045, %v1058
        %v1060 = vcombine.high %v1052, 0
        %v1061 = vcombine.high %v1059, 0
        %v1064 = vunpack.c.l.s4 1983009808
        %v1065 = vunpack.c.0.s8 %v1064
        %v1066 = vlaneseq
        %v1067 = vshrl.u32 %v1066, 7
        %v1068 = vsub.s32 %v1065, %v1067
        %v1069 = vrot.slane %v984, %v1068
        %v1072 = vunpack.c.l.s4 1983009808
        %v1073 = vunpack.c.0.s8 %v1072
        %v1074 = vlaneseq
        %v1075 = vshrl.u32 %v1074, 7
        %v1076 = vsub.s32 %v1073, %v1075
        %v1077 = vrot.slane %v990, %v1076
        %v1078 = vcombine.low %v1069, %v1077
        %v1079 = vcombine.high %v1069, %v1077
        %v1081 = vunpack.c.l.s4 1934713408
        %v1082 = vunpack.c.0.s8 %v1081
        %v1083 = vlaneseq
        %v1084 = vshrl.u32 %v1083, 7
        %v1085 = vsub.s32 %v1082, %v1084
        %v1086 = vrot.slane %v1078, %v1085
        %v1088 = vunpack.c.l.s4 1934713408
        %v1089 = vunpack.c.0.s8 %v1088
        %v1090 = vlaneseq
        %v1091 = vshrl.u32 %v1090, 7
        %v1092 = vsub.s32 %v1089, %v1091
        %v1093 = vrot.slane %v1079, %v1092
        %v1094 = vcombine.high %v1086, 0
        %v1095 = vcombine.high %v1093, 0
        %v1098 = vunpack.c.l.s4 1983009808
        %v1099 = vunpack.c.0.s8 %v1098
        %v1100 = vlaneseq
        %v1101 = vshrl.u32 %v1100, 7
        %v1102 = vsub.s32 %v1099, %v1101
        %v1103 = vrot.slane %v987, %v1102
        %v1106 = vunpack.c.l.s4 1983009808
        %v1107 = vunpack.c.0.s8 %v1106
        %v1108 = vlaneseq
        %v1109 = vshrl.u32 %v1108, 7
        %v1110 = vsub.s32 %v1107, %v1109
        %v1111 = vrot.slane %v993, %v1110
        %v1112 = vcombine.low %v1103, %v1111
        %v1113 = vcombine.high %v1103, %v1111
        %v1115 = vunpack.c.l.s4 1934713408
        %v1116 = vunpack.c.0.s8 %v1115
        %v1117 = vlaneseq
        %v1118 = vshrl.u32 %v1117, 7
        %v1119 = vsub.s32 %v1116, %v1118
        %v1120 = vrot.slane %v1112, %v1119
        %v1122 = vunpack.c.l.s4 1934713408
        %v1123 = vunpack.c.0.s8 %v1122
        %v1124 = vlaneseq
        %v1125 = vshrl.u32 %v1124, 7
        %v1126 = vsub.s32 %v1123, %v1125
        %v1127 = vrot.slane %v1113, %v1126
        %v1128 = vcombine.high %v1120, 0
        %v1129 = vcombine.high %v1127, 0
        %v1131 = vunpack.c.l.b16 %v1052
        %v1132 = vpack.c.b16 %v1131, %v1131
        %1133 = vrot.lane.b32.xlu0 %v1132, 16
        %v1134 = vpop.permute.xlu0 %1133
        %v1136 = vunpack.c.l.b16 %v1026
        %v1137 = vpack.c.b16 %v1136, %v1136
        %1138 = vrot.lane.b32.xlu0 %v1137, 32
        %v1139 = vpop.permute.xlu0 %1138
        %v1141 = vunpack.c.l.b16 %v1060
        %v1142 = vpack.c.b16 %v1141, %v1141
        %1143 = vrot.lane.b32.xlu0 %v1142, 48
        %v1144 = vpop.permute.xlu0 %1143
        %v1146 = vunpack.c.l.b16 %v1025
        %v1147 = vpack.c.b16 %v1146, %v1146
        %1148 = vrot.lane.b32.xlu0 %v1147, 64
        %v1149 = vpop.permute.xlu0 %1148
        %v1151 = vunpack.c.l.b16 %v1059
        %v1152 = vpack.c.b16 %v1151, %v1151
        %1153 = vrot.lane.b32.xlu0 %v1152, 80
        %v1154 = vpop.permute.xlu0 %1153
        %v1156 = vunpack.c.l.b16 %v1027
        %v1157 = vpack.c.b16 %v1156, %v1156
        %1158 = vrot.lane.b32.xlu0 %v1157, 96
        %v1159 = vpop.permute.xlu0 %1158
        %v1161 = vunpack.c.l.b16 %v1061
        %v1162 = vpack.c.b16 %v1161, %v1161
        %1163 = vrot.lane.b32.xlu0 %v1162, 112
        %v1164 = vpop.permute.xlu0 %1163
        %v1166 = vunpack.c.l.b16 %v1120
        %v1167 = vpack.c.b16 %v1166, %v1166
        %1168 = vrot.lane.b32.xlu0 %v1167, 16
        %v1169 = vpop.permute.xlu0 %1168
        %v1171 = vunpack.c.l.b16 %v1094
        %v1172 = vpack.c.b16 %v1171, %v1171
        %1173 = vrot.lane.b32.xlu0 %v1172, 32
        %v1174 = vpop.permute.xlu0 %1173
        %v1176 = vunpack.c.l.b16 %v1128
        %v1177 = vpack.c.b16 %v1176, %v1176
        %1178 = vrot.lane.b32.xlu0 %v1177, 48
        %v1179 = vpop.permute.xlu0 %1178
        %v1181 = vunpack.c.l.b16 %v1093
        %v1182 = vpack.c.b16 %v1181, %v1181
        %1183 = vrot.lane.b32.xlu0 %v1182, 64
        %v1184 = vpop.permute.xlu0 %1183
        %v1186 = vunpack.c.l.b16 %v1127
        %v1187 = vpack.c.b16 %v1186, %v1186
        %1188 = vrot.lane.b32.xlu0 %v1187, 80
        %v1189 = vpop.permute.xlu0 %1188
        %v1191 = vunpack.c.l.b16 %v1095
        %v1192 = vpack.c.b16 %v1191, %v1191
        %1193 = vrot.lane.b32.xlu0 %v1192, 96
        %v1194 = vpop.permute.xlu0 %1193
        %v1196 = vunpack.c.l.b16 %v1129
        %v1197 = vpack.c.b16 %v1196, %v1196
        %1198 = vrot.lane.b32.xlu0 %v1197, 112
        %v1199 = vpop.permute.xlu0 %1198
        %v1202 = vsel %vm894, %v1018, %v1134
        %v1204 = vsel %vm898, %v1202, %v1139
        %v1206 = vsel %vm901, %v1204, %v1144
        %v1208 = vsel %vm904, %v1206, %v1149
        %v1210 = vsel %vm907, %v1208, %v1154
        %v1212 = vsel %vm910, %v1210, %v1159
        %v1214 = vsel %vm913, %v1212, %v1164
        %v1217 = vsel %vm894, %v1086, %v1169
        %v1219 = vsel %vm898, %v1217, %v1174
        %v1221 = vsel %vm901, %v1219, %v1179
        %v1223 = vsel %vm904, %v1221, %v1184
        %v1225 = vsel %vm907, %v1223, %v1189
        %v1227 = vsel %vm910, %v1225, %v1194
        %v1229 = vsel %vm913, %v1227, %v1199
        %v1232 = vunpack.c.l.b16 %v1214
        %v1233 = vunpack.c.l.b16 %v1229
        %v1234 = vpack.c.b16 %v1233, %v1232
        %v1235 = vrot.slane %v1234, 6
        %1237 = vst [vmem:[#allocation3] sm:$0xcc] %v1235
        %v1238 = vld [vmem:[#allocation2] sm:$0xf]
        %v1239 = vld [vmem:[#allocation2 + $0x4] sm:$0xf]
        %v1240 = vld [vmem:[#allocation2 + $0xc] sm:$0xf]
        %v1241 = vld [vmem:[#allocation2 + $0x10] sm:$0xf]
        %v1242 = vld [vmem:[#allocation2 + $0x18] sm:$0xf]
        %v1243 = vld [vmem:[#allocation2 + $0x1c] sm:$0xf]
        %v1244 = vld [vmem:[#allocation2 + $0x24] sm:$0xf]
        %v1245 = vld [vmem:[#allocation2 + $0x28] sm:$0xf]
        %1254 = vrot.lane.b32.xlu0 %v1238, 126
        %v1255 = vpop.permute.xlu0 %1254
        %1256 = vrot.lane.b32.xlu0 %v1239, 126
        %v1257 = vpop.permute.xlu0 %1256
        %1258 = vrot.lane.b32.xlu0 %v1240, 126
        %v1259 = vpop.permute.xlu0 %1258
        %1260 = vrot.lane.b32.xlu0 %v1241, 126
        %v1261 = vpop.permute.xlu0 %1260
        %1262 = vrot.lane.b32.xlu0 %v1242, 126
        %v1263 = vpop.permute.xlu0 %1262
        %1264 = vrot.lane.b32.xlu0 %v1243, 126
        %v1265 = vpop.permute.xlu0 %1264
        %1266 = vrot.lane.b32.xlu0 %v1244, 126
        %v1267 = vpop.permute.xlu0 %1266
        %1268 = vrot.lane.b32.xlu0 %v1245, 126
        %v1269 = vpop.permute.xlu0 %1268
        %v1272 = vpack.i.b16 %v1259, %v1255
        %v1273 = vshrl.u32 %v1255, 16
        %v1274 = vshrl.u32 %v1259, 16
        %v1275 = vpack.i.b16 %v1274, %v1273
        %v1278 = vpack.i.b16 %v1267, %v1263
        %v1279 = vshrl.u32 %v1263, 16
        %v1280 = vshrl.u32 %v1267, 16
        %v1281 = vpack.i.b16 %v1280, %v1279
        %v1284 = vpack.i.b16 %v1261, %v1257
        %v1285 = vshrl.u32 %v1257, 16
        %v1286 = vshrl.u32 %v1261, 16
        %v1287 = vpack.i.b16 %v1286, %v1285
        %v1290 = vpack.i.b16 %v1269, %v1265
        %v1291 = vshrl.u32 %v1265, 16
        %v1292 = vshrl.u32 %v1269, 16
        %v1293 = vpack.i.b16 %v1292, %v1291
        %v1296 = vunpack.c.l.s4 1983009808
        %v1297 = vunpack.c.0.s8 %v1296
        %v1298 = vlaneseq
        %v1299 = vshrl.u32 %v1298, 7
        %v1300 = vsub.s32 %v1297, %v1299
        %v1301 = vrot.slane %v1272, %v1300
        %v1304 = vunpack.c.l.s4 1983009808
        %v1305 = vunpack.c.0.s8 %v1304
        %v1306 = vlaneseq
        %v1307 = vshrl.u32 %v1306, 7
        %v1308 = vsub.s32 %v1305, %v1307
        %v1309 = vrot.slane %v1278, %v1308
        %v1310 = vcombine.low %v1301, %v1309
        %v1311 = vcombine.high %v1301, %v1309
        %v1313 = vunpack.c.l.s4 1934713408
        %v1314 = vunpack.c.0.s8 %v1313
        %v1315 = vlaneseq
        %v1316 = vshrl.u32 %v1315, 7
        %v1317 = vsub.s32 %v1314, %v1316
        %v1318 = vrot.slane %v1310, %v1317
        %v1320 = vunpack.c.l.s4 1934713408
        %v1321 = vunpack.c.0.s8 %v1320
        %v1322 = vlaneseq
        %v1323 = vshrl.u32 %v1322, 7
        %v1324 = vsub.s32 %v1321, %v1323
        %v1325 = vrot.slane %v1311, %v1324
        %v1326 = vcombine.high %v1318, 0
        %v1327 = vcombine.high %v1325, 0
        %v1330 = vunpack.c.l.s4 1983009808
        %v1331 = vunpack.c.0.s8 %v1330
        %v1332 = vlaneseq
        %v1333 = vshrl.u32 %v1332, 7
        %v1334 = vsub.s32 %v1331, %v1333
        %v1335 = vrot.slane %v1275, %v1334
        %v1338 = vunpack.c.l.s4 1983009808
        %v1339 = vunpack.c.0.s8 %v1338
        %v1340 = vlaneseq
        %v1341 = vshrl.u32 %v1340, 7
        %v1342 = vsub.s32 %v1339, %v1341
        %v1343 = vrot.slane %v1281, %v1342
        %v1344 = vcombine.low %v1335, %v1343
        %v1345 = vcombine.high %v1335, %v1343
        %v1347 = vunpack.c.l.s4 1934713408
        %v1348 = vunpack.c.0.s8 %v1347
        %v1349 = vlaneseq
        %v1350 = vshrl.u32 %v1349, 7
        %v1351 = vsub.s32 %v1348, %v1350
        %v1352 = vrot.slane %v1344, %v1351
        %v1354 = vunpack.c.l.s4 1934713408
        %v1355 = vunpack.c.0.s8 %v1354
        %v1356 = vlaneseq
        %v1357 = vshrl.u32 %v1356, 7
        %v1358 = vsub.s32 %v1355, %v1357
        %v1359 = vrot.slane %v1345, %v1358
        %v1360 = vcombine.high %v1352, 0
        %v1361 = vcombine.high %v1359, 0
        %v1364 = vunpack.c.l.s4 1983009808
        %v1365 = vunpack.c.0.s8 %v1364
        %v1366 = vlaneseq
        %v1367 = vshrl.u32 %v1366, 7
        %v1368 = vsub.s32 %v1365, %v1367
        %v1369 = vrot.slane %v1284, %v1368
        %v1372 = vunpack.c.l.s4 1983009808
        %v1373 = vunpack.c.0.s8 %v1372
        %v1374 = vlaneseq
        %v1375 = vshrl.u32 %v1374, 7
        %v1376 = vsub.s32 %v1373, %v1375
        %v1377 = vrot.slane %v1290, %v1376
        %v1378 = vcombine.low %v1369, %v1377
        %v1379 = vcombine.high %v1369, %v1377
        %v1381 = vunpack.c.l.s4 1934713408
        %v1382 = vunpack.c.0.s8 %v1381
        %v1383 = vlaneseq
        %v1384 = vshrl.u32 %v1383, 7
        %v1385 = vsub.s32 %v1382, %v1384
        %v1386 = vrot.slane %v1378, %v1385
        %v1388 = vunpack.c.l.s4 1934713408
        %v1389 = vunpack.c.0.s8 %v1388
        %v1390 = vlaneseq
        %v1391 = vshrl.u32 %v1390, 7
        %v1392 = vsub.s32 %v1389, %v1391
        %v1393 = vrot.slane %v1379, %v1392
        %v1394 = vcombine.high %v1386, 0
        %v1395 = vcombine.high %v1393, 0
        %v1398 = vunpack.c.l.s4 1983009808
        %v1399 = vunpack.c.0.s8 %v1398
        %v1400 = vlaneseq
        %v1401 = vshrl.u32 %v1400, 7
        %v1402 = vsub.s32 %v1399, %v1401
        %v1403 = vrot.slane %v1287, %v1402
        %v1406 = vunpack.c.l.s4 1983009808
        %v1407 = vunpack.c.0.s8 %v1406
        %v1408 = vlaneseq
        %v1409 = vshrl.u32 %v1408, 7
        %v1410 = vsub.s32 %v1407, %v1409
        %v1411 = vrot.slane %v1293, %v1410
        %v1412 = vcombine.low %v1403, %v1411
        %v1413 = vcombine.high %v1403, %v1411
        %v1415 = vunpack.c.l.s4 1934713408
        %v1416 = vunpack.c.0.s8 %v1415
        %v1417 = vlaneseq
        %v1418 = vshrl.u32 %v1417, 7
        %v1419 = vsub.s32 %v1416, %v1418
        %v1420 = vrot.slane %v1412, %v1419
        %v1422 = vunpack.c.l.s4 1934713408
        %v1423 = vunpack.c.0.s8 %v1422
        %v1424 = vlaneseq
        %v1425 = vshrl.u32 %v1424, 7
        %v1426 = vsub.s32 %v1423, %v1425
        %v1427 = vrot.slane %v1413, %v1426
        %v1428 = vcombine.high %v1420, 0
        %v1429 = vcombine.high %v1427, 0
        %v1431 = vunpack.c.l.b16 %v1352
        %v1432 = vpack.c.b16 %v1431, %v1431
        %1433 = vrot.lane.b32.xlu0 %v1432, 16
        %v1434 = vpop.permute.xlu0 %1433
        %v1436 = vunpack.c.l.b16 %v1326
        %v1437 = vpack.c.b16 %v1436, %v1436
        %1438 = vrot.lane.b32.xlu0 %v1437, 32
        %v1439 = vpop.permute.xlu0 %1438
        %v1441 = vunpack.c.l.b16 %v1360
        %v1442 = vpack.c.b16 %v1441, %v1441
        %1443 = vrot.lane.b32.xlu0 %v1442, 48
        %v1444 = vpop.permute.xlu0 %1443
        %v1446 = vunpack.c.l.b16 %v1325
        %v1447 = vpack.c.b16 %v1446, %v1446
        %1448 = vrot.lane.b32.xlu0 %v1447, 64
        %v1449 = vpop.permute.xlu0 %1448
        %v1451 = vunpack.c.l.b16 %v1359
        %v1452 = vpack.c.b16 %v1451, %v1451
        %1453 = vrot.lane.b32.xlu0 %v1452, 80
        %v1454 = vpop.permute.xlu0 %1453
        %v1456 = vunpack.c.l.b16 %v1327
        %v1457 = vpack.c.b16 %v1456, %v1456
        %1458 = vrot.lane.b32.xlu0 %v1457, 96
        %v1459 = vpop.permute.xlu0 %1458
        %v1461 = vunpack.c.l.b16 %v1361
        %v1462 = vpack.c.b16 %v1461, %v1461
        %1463 = vrot.lane.b32.xlu0 %v1462, 112
        %v1464 = vpop.permute.xlu0 %1463
        %v1466 = vunpack.c.l.b16 %v1420
        %v1467 = vpack.c.b16 %v1466, %v1466
        %1468 = vrot.lane.b32.xlu0 %v1467, 16
        %v1469 = vpop.permute.xlu0 %1468
        %v1471 = vunpack.c.l.b16 %v1394
        %v1472 = vpack.c.b16 %v1471, %v1471
        %1473 = vrot.lane.b32.xlu0 %v1472, 32
        %v1474 = vpop.permute.xlu0 %1473
        %v1476 = vunpack.c.l.b16 %v1428
        %v1477 = vpack.c.b16 %v1476, %v1476
        %1478 = vrot.lane.b32.xlu0 %v1477, 48
        %v1479 = vpop.permute.xlu0 %1478
        %v1481 = vunpack.c.l.b16 %v1393
        %v1482 = vpack.c.b16 %v1481, %v1481
        %1483 = vrot.lane.b32.xlu0 %v1482, 64
        %v1484 = vpop.permute.xlu0 %1483
        %v1486 = vunpack.c.l.b16 %v1427
        %v1487 = vpack.c.b16 %v1486, %v1486
        %1488 = vrot.lane.b32.xlu0 %v1487, 80
        %v1489 = vpop.permute.xlu0 %1488
        %v1491 = vunpack.c.l.b16 %v1395
        %v1492 = vpack.c.b16 %v1491, %v1491
        %1493 = vrot.lane.b32.xlu0 %v1492, 96
        %v1494 = vpop.permute.xlu0 %1493
        %v1496 = vunpack.c.l.b16 %v1429
        %v1497 = vpack.c.b16 %v1496, %v1496
        %1498 = vrot.lane.b32.xlu0 %v1497, 112
        %v1499 = vpop.permute.xlu0 %1498
        %v1502 = vsel %vm894, %v1318, %v1434
        %v1504 = vsel %vm898, %v1502, %v1439
        %v1506 = vsel %vm901, %v1504, %v1444
        %v1508 = vsel %vm904, %v1506, %v1449
        %v1510 = vsel %vm907, %v1508, %v1454
        %v1512 = vsel %vm910, %v1510, %v1459
        %v1514 = vsel %vm913, %v1512, %v1464
        %v1517 = vsel %vm894, %v1386, %v1469
        %v1519 = vsel %vm898, %v1517, %v1474
        %v1521 = vsel %vm901, %v1519, %v1479
        %v1523 = vsel %vm904, %v1521, %v1484
        %v1525 = vsel %vm907, %v1523, %v1489
        %v1527 = vsel %vm910, %v1525, %v1494
        %v1529 = vsel %vm913, %v1527, %v1499
        %v1532 = vunpack.c.l.b16 %v1514
        %v1533 = vunpack.c.l.b16 %v1529
        %v1534 = vpack.c.b16 %v1533, %v1532
        %1536 = vst [vmem:[#allocation3 + $0x8] sm:$0x33] %v1534
        %v1537 = vld [vmem:[#allocation2] sm:$0xf]
        %v1538 = vld [vmem:[#allocation2 + $0x4] sm:$0xf]
        %v1539 = vld [vmem:[#allocation2 + $0x8] sm:$0x1]
        %v1540 = vld [vmem:[#allocation2 + $0xc] sm:$0xf]
        %v1541 = vld [vmem:[#allocation2 + $0x10] sm:$0xf]
        %v1542 = vld [vmem:[#allocation2 + $0x14] sm:$0x1]
        %v1543 = vld [vmem:[#allocation2 + $0x18] sm:$0xf]
        %v1544 = vld [vmem:[#allocation2 + $0x1c] sm:$0xf]
        %v1545 = vld [vmem:[#allocation2 + $0x20] sm:$0x1]
        %v1546 = vld [vmem:[#allocation2 + $0x24] sm:$0xf]
        %v1547 = vld [vmem:[#allocation2 + $0x28] sm:$0xf]
        %v1548 = vld [vmem:[#allocation2 + $0x2c] sm:$0x1]
        %vm1549 = vsmask.f32 3328
        %vm1550 = vsmask.f32 7440
        %vm1551 = vmor %vm1549, %vm1550
        %v1553 = vshrl.u32 %v1537, 16
        %v1555 = vrot.slane %v1553, 4
        %v1556 = vshll.u32 %v1537, 16
        %v1558 = vrot.slane %v1556, 5
        %v1559 = vor.u32 %v1555, %v1558
        %v1560 = vrot.slane %v1559, 4
        %v1562 = vshll.u32 %v1538, 16
        %v1564 = vrot.slane %v1562, 5
        %v1565 = vsel %vm1551, %v1560, %v1564
        %v1566 = vshrl.u32 %v1538, 16
        %v1568 = vrot.slane %v1566, 4
        %v1569 = vor.u32 %v1568, %v1564
        %v1570 = vrot.slane %v1569, 4
        %v1572 = vshll.u32 %v1539, 16
        %v1574 = vrot.slane %v1572, 5
        %v1575 = vsel %vm1551, %v1570, %v1574
        %v1577 = vshrl.u32 %v1540, 16
        %v1579 = vrot.slane %v1577, 4
        %v1580 = vshll.u32 %v1540, 16
        %v1582 = vrot.slane %v1580, 5
        %v1583 = vor.u32 %v1579, %v1582
        %v1584 = vrot.slane %v1583, 4
        %v1586 = vshll.u32 %v1541, 16
        %v1588 = vrot.slane %v1586, 5
        %v1589 = vsel %vm1551, %v1584, %v1588
        %v1590 = vshrl.u32 %v1541, 16
        %v1592 = vrot.slane %v1590, 4
        %v1593 = vor.u32 %v1592, %v1588
        %v1594 = vrot.slane %v1593, 4
        %v1596 = vshll.u32 %v1542, 16
        %v1598 = vrot.slane %v1596, 5
        %v1599 = vsel %vm1551, %v1594, %v1598
        %v1601 = vshrl.u32 %v1543, 16
        %v1603 = vrot.slane %v1601, 4
        %v1604 = vshll.u32 %v1543, 16
        %v1606 = vrot.slane %v1604, 5
        %v1607 = vor.u32 %v1603, %v1606
        %v1608 = vrot.slane %v1607, 4
        %v1610 = vshll.u32 %v1544, 16
        %v1612 = vrot.slane %v1610, 5
        %v1613 = vsel %vm1551, %v1608, %v1612
        %v1614 = vshrl.u32 %v1544, 16
        %v1616 = vrot.slane %v1614, 4
        %v1617 = vor.u32 %v1616, %v1612
        %v1618 = vrot.slane %v1617, 4
        %v1620 = vshll.u32 %v1545, 16
        %v1622 = vrot.slane %v1620, 5
        %v1623 = vsel %vm1551, %v1618, %v1622
        %v1625 = vshrl.u32 %v1546, 16
        %v1627 = vrot.slane %v1625, 4
        %v1628 = vshll.u32 %v1546, 16
        %v1630 = vrot.slane %v1628, 5
        %v1631 = vor.u32 %v1627, %v1630
        %v1632 = vrot.slane %v1631, 4
        %v1634 = vshll.u32 %v1547, 16
        %v1636 = vrot.slane %v1634, 5
        %v1637 = vsel %vm1551, %v1632, %v1636
        %v1638 = vshrl.u32 %v1547, 16
        %v1640 = vrot.slane %v1638, 4
        %v1641 = vor.u32 %v1640, %v1636
        %v1642 = vrot.slane %v1641, 4
        %v1644 = vshll.u32 %v1548, 16
        %v1646 = vrot.slane %v1644, 5
        %v1647 = vsel %vm1551, %v1642, %v1646
        %v1650 = vpack.i.b16 %v1589, %v1565
        %v1651 = vshrl.u32 %v1565, 16
        %v1652 = vshrl.u32 %v1589, 16
        %v1653 = vpack.i.b16 %v1652, %v1651
        %v1656 = vpack.i.b16 %v1637, %v1613
        %v1657 = vshrl.u32 %v1613, 16
        %v1658 = vshrl.u32 %v1637, 16
        %v1659 = vpack.i.b16 %v1658, %v1657
        %v1662 = vpack.i.b16 %v1599, %v1575
        %v1663 = vshrl.u32 %v1575, 16
        %v1664 = vshrl.u32 %v1599, 16
        %v1665 = vpack.i.b16 %v1664, %v1663
        %v1668 = vpack.i.b16 %v1647, %v1623
        %v1669 = vshrl.u32 %v1623, 16
        %v1670 = vshrl.u32 %v1647, 16
        %v1671 = vpack.i.b16 %v1670, %v1669
        %v1674 = vunpack.c.l.s4 1983009808
        %v1675 = vunpack.c.0.s8 %v1674
        %v1676 = vlaneseq
        %v1677 = vshrl.u32 %v1676, 7
        %v1678 = vsub.s32 %v1675, %v1677
        %v1679 = vrot.slane %v1650, %v1678
        %v1682 = vunpack.c.l.s4 1983009808
        %v1683 = vunpack.c.0.s8 %v1682
        %v1684 = vlaneseq
        %v1685 = vshrl.u32 %v1684, 7
        %v1686 = vsub.s32 %v1683, %v1685
        %v1687 = vrot.slane %v1656, %v1686
        %v1688 = vcombine.low %v1679, %v1687
        %v1689 = vcombine.high %v1679, %v1687
        %v1691 = vunpack.c.l.s4 1934713408
        %v1692 = vunpack.c.0.s8 %v1691
        %v1693 = vlaneseq
        %v1694 = vshrl.u32 %v1693, 7
        %v1695 = vsub.s32 %v1692, %v1694
        %v1696 = vrot.slane %v1688, %v1695
        %v1698 = vunpack.c.l.s4 1934713408
        %v1699 = vunpack.c.0.s8 %v1698
        %v1700 = vlaneseq
        %v1701 = vshrl.u32 %v1700, 7
        %v1702 = vsub.s32 %v1699, %v1701
        %v1703 = vrot.slane %v1689, %v1702
        %v1704 = vcombine.high %v1696, 0
        %v1705 = vcombine.high %v1703, 0
        %v1708 = vunpack.c.l.s4 1983009808
        %v1709 = vunpack.c.0.s8 %v1708
        %v1710 = vlaneseq
        %v1711 = vshrl.u32 %v1710, 7
        %v1712 = vsub.s32 %v1709, %v1711
        %v1713 = vrot.slane %v1653, %v1712
        %v1716 = vunpack.c.l.s4 1983009808
        %v1717 = vunpack.c.0.s8 %v1716
        %v1718 = vlaneseq
        %v1719 = vshrl.u32 %v1718, 7
        %v1720 = vsub.s32 %v1717, %v1719
        %v1721 = vrot.slane %v1659, %v1720
        %v1722 = vcombine.low %v1713, %v1721
        %v1723 = vcombine.high %v1713, %v1721
        %v1725 = vunpack.c.l.s4 1934713408
        %v1726 = vunpack.c.0.s8 %v1725
        %v1727 = vlaneseq
        %v1728 = vshrl.u32 %v1727, 7
        %v1729 = vsub.s32 %v1726, %v1728
        %v1730 = vrot.slane %v1722, %v1729
        %v1732 = vunpack.c.l.s4 1934713408
        %v1733 = vunpack.c.0.s8 %v1732
        %v1734 = vlaneseq
        %v1735 = vshrl.u32 %v1734, 7
        %v1736 = vsub.s32 %v1733, %v1735
        %v1737 = vrot.slane %v1723, %v1736
        %v1738 = vcombine.high %v1730, 0
        %v1739 = vcombine.high %v1737, 0
        %v1742 = vunpack.c.l.s4 1983009808
        %v1743 = vunpack.c.0.s8 %v1742
        %v1744 = vlaneseq
        %v1745 = vshrl.u32 %v1744, 7
        %v1746 = vsub.s32 %v1743, %v1745
        %v1747 = vrot.slane %v1662, %v1746
        %v1750 = vunpack.c.l.s4 1983009808
        %v1751 = vunpack.c.0.s8 %v1750
        %v1752 = vlaneseq
        %v1753 = vshrl.u32 %v1752, 7
        %v1754 = vsub.s32 %v1751, %v1753
        %v1755 = vrot.slane %v1668, %v1754
        %v1756 = vcombine.low %v1747, %v1755
        %v1757 = vcombine.high %v1747, %v1755
        %v1759 = vunpack.c.l.s4 1934713408
        %v1760 = vunpack.c.0.s8 %v1759
        %v1761 = vlaneseq
        %v1762 = vshrl.u32 %v1761, 7
        %v1763 = vsub.s32 %v1760, %v1762
        %v1764 = vrot.slane %v1756, %v1763
        %v1766 = vunpack.c.l.s4 1934713408
        %v1767 = vunpack.c.0.s8 %v1766
        %v1768 = vlaneseq
        %v1769 = vshrl.u32 %v1768, 7
        %v1770 = vsub.s32 %v1767, %v1769
        %v1771 = vrot.slane %v1757, %v1770
        %v1772 = vcombine.high %v1764, 0
        %v1773 = vcombine.high %v1771, 0
        %v1776 = vunpack.c.l.s4 1983009808
        %v1777 = vunpack.c.0.s8 %v1776
        %v1778 = vlaneseq
        %v1779 = vshrl.u32 %v1778, 7
        %v1780 = vsub.s32 %v1777, %v1779
        %v1781 = vrot.slane %v1665, %v1780
        %v1784 = vunpack.c.l.s4 1983009808
        %v1785 = vunpack.c.0.s8 %v1784
        %v1786 = vlaneseq
        %v1787 = vshrl.u32 %v1786, 7
        %v1788 = vsub.s32 %v1785, %v1787
        %v1789 = vrot.slane %v1671, %v1788
        %v1790 = vcombine.low %v1781, %v1789
        %v1791 = vcombine.high %v1781, %v1789
        %v1793 = vunpack.c.l.s4 1934713408
        %v1794 = vunpack.c.0.s8 %v1793
        %v1795 = vlaneseq
        %v1796 = vshrl.u32 %v1795, 7
        %v1797 = vsub.s32 %v1794, %v1796
        %v1798 = vrot.slane %v1790, %v1797
        %v1800 = vunpack.c.l.s4 1934713408
        %v1801 = vunpack.c.0.s8 %v1800
        %v1802 = vlaneseq
        %v1803 = vshrl.u32 %v1802, 7
        %v1804 = vsub.s32 %v1801, %v1803
        %v1805 = vrot.slane %v1791, %v1804
        %v1806 = vcombine.high %v1798, 0
        %v1807 = vcombine.high %v1805, 0
        %v1809 = vunpack.c.l.b16 %v1730
        %v1810 = vpack.c.b16 %v1809, %v1809
        %1811 = vrot.lane.b32.xlu0 %v1810, 16
        %v1812 = vpop.permute.xlu0 %1811
        %v1814 = vunpack.c.l.b16 %v1704
        %v1815 = vpack.c.b16 %v1814, %v1814
        %1816 = vrot.lane.b32.xlu0 %v1815, 32
        %v1817 = vpop.permute.xlu0 %1816
        %v1819 = vunpack.c.l.b16 %v1738
        %v1820 = vpack.c.b16 %v1819, %v1819
        %1821 = vrot.lane.b32.xlu0 %v1820, 48
        %v1822 = vpop.permute.xlu0 %1821
        %v1824 = vunpack.c.l.b16 %v1703
        %v1825 = vpack.c.b16 %v1824, %v1824
        %1826 = vrot.lane.b32.xlu0 %v1825, 64
        %v1827 = vpop.permute.xlu0 %1826
        %v1829 = vunpack.c.l.b16 %v1737
        %v1830 = vpack.c.b16 %v1829, %v1829
        %1831 = vrot.lane.b32.xlu0 %v1830, 80
        %v1832 = vpop.permute.xlu0 %1831
        %v1834 = vunpack.c.l.b16 %v1705
        %v1835 = vpack.c.b16 %v1834, %v1834
        %1836 = vrot.lane.b32.xlu0 %v1835, 96
        %v1837 = vpop.permute.xlu0 %1836
        %v1839 = vunpack.c.l.b16 %v1739
        %v1840 = vpack.c.b16 %v1839, %v1839
        %1841 = vrot.lane.b32.xlu0 %v1840, 112
        %v1842 = vpop.permute.xlu0 %1841
        %v1844 = vunpack.c.l.b16 %v1798
        %v1845 = vpack.c.b16 %v1844, %v1844
        %1846 = vrot.lane.b32.xlu0 %v1845, 16
        %v1847 = vpop.permute.xlu0 %1846
        %v1849 = vunpack.c.l.b16 %v1772
        %v1850 = vpack.c.b16 %v1849, %v1849
        %1851 = vrot.lane.b32.xlu0 %v1850, 32
        %v1852 = vpop.permute.xlu0 %1851
        %v1854 = vunpack.c.l.b16 %v1806
        %v1855 = vpack.c.b16 %v1854, %v1854
        %1856 = vrot.lane.b32.xlu0 %v1855, 48
        %v1857 = vpop.permute.xlu0 %1856
        %v1859 = vunpack.c.l.b16 %v1771
        %v1860 = vpack.c.b16 %v1859, %v1859
        %1861 = vrot.lane.b32.xlu0 %v1860, 64
        %v1862 = vpop.permute.xlu0 %1861
        %v1864 = vunpack.c.l.b16 %v1805
        %v1865 = vpack.c.b16 %v1864, %v1864
        %1866 = vrot.lane.b32.xlu0 %v1865, 80
        %v1867 = vpop.permute.xlu0 %1866
        %v1869 = vunpack.c.l.b16 %v1773
        %v1870 = vpack.c.b16 %v1869, %v1869
        %1871 = vrot.lane.b32.xlu0 %v1870, 96
        %v1872 = vpop.permute.xlu0 %1871
        %v1874 = vunpack.c.l.b16 %v1807
        %v1875 = vpack.c.b16 %v1874, %v1874
        %1876 = vrot.lane.b32.xlu0 %v1875, 112
        %v1877 = vpop.permute.xlu0 %1876
        %v1880 = vsel %vm894, %v1696, %v1812
        %v1882 = vsel %vm898, %v1880, %v1817
        %v1884 = vsel %vm901, %v1882, %v1822
        %v1886 = vsel %vm904, %v1884, %v1827
        %v1888 = vsel %vm907, %v1886, %v1832
        %v1890 = vsel %vm910, %v1888, %v1837
        %v1892 = vsel %vm913, %v1890, %v1842
        %v1895 = vsel %vm894, %v1764, %v1847
        %v1897 = vsel %vm898, %v1895, %v1852
        %v1899 = vsel %vm901, %v1897, %v1857
        %v1901 = vsel %vm904, %v1899, %v1862
        %v1903 = vsel %vm907, %v1901, %v1867
        %v1905 = vsel %vm910, %v1903, %v1872
        %v1907 = vsel %vm913, %v1905, %v1877
        %v1910 = vunpack.c.l.b16 %v1892
        %v1911 = vunpack.c.l.b16 %v1907
        %v1912 = vpack.c.b16 %v1911, %v1910
        %v1913 = vrot.slane %v1912, 6
        %1915 = vst [vmem:[#allocation3 + $0x8] sm:$0xcc] %v1913
        %v1916 = vld [vmem:[#allocation2] sm:$0xf]
        %v1917 = vld [vmem:[#allocation2 + $0x4] sm:$0xf]
        %v1918 = vld [vmem:[#allocation2 + $0x8] sm:$0x1]
        %v1919 = vld [vmem:[#allocation2 + $0xc] sm:$0xf]
        %v1920 = vld [vmem:[#allocation2 + $0x10] sm:$0xf]
        %v1921 = vld [vmem:[#allocation2 + $0x14] sm:$0x1]
        %v1922 = vld [vmem:[#allocation2 + $0x18] sm:$0xf]
        %v1923 = vld [vmem:[#allocation2 + $0x1c] sm:$0xf]
        %v1924 = vld [vmem:[#allocation2 + $0x20] sm:$0x1]
        %v1925 = vld [vmem:[#allocation2 + $0x24] sm:$0xf]
        %v1926 = vld [vmem:[#allocation2 + $0x28] sm:$0xf]
        %v1927 = vld [vmem:[#allocation2 + $0x2c] sm:$0x1]
        %v1929 = vshrl.u32 %v1916, 16
        %v1931 = vrot.slane %v1929, 4
        %v1932 = vshll.u32 %v1916, 16
        %v1934 = vrot.slane %v1932, 5
        %v1935 = vor.u32 %v1931, %v1934
        %v1936 = vrot.slane %v1935, 4
        %v1938 = vshll.u32 %v1917, 16
        %v1940 = vrot.slane %v1938, 5
        %v1941 = vsel %vm1551, %v1936, %v1940
        %v1942 = vshrl.u32 %v1917, 16
        %v1944 = vrot.slane %v1942, 4
        %v1945 = vor.u32 %v1944, %v1940
        %v1946 = vrot.slane %v1945, 4
        %v1948 = vshll.u32 %v1918, 16
        %v1950 = vrot.slane %v1948, 5
        %v1951 = vsel %vm1551, %v1946, %v1950
        %v1953 = vshrl.u32 %v1919, 16
        %v1955 = vrot.slane %v1953, 4
        %v1956 = vshll.u32 %v1919, 16
        %v1958 = vrot.slane %v1956, 5
        %v1959 = vor.u32 %v1955, %v1958
        %v1960 = vrot.slane %v1959, 4
        %v1962 = vshll.u32 %v1920, 16
        %v1964 = vrot.slane %v1962, 5
        %v1965 = vsel %vm1551, %v1960, %v1964
        %v1966 = vshrl.u32 %v1920, 16
        %v1968 = vrot.slane %v1966, 4
        %v1969 = vor.u32 %v1968, %v1964
        %v1970 = vrot.slane %v1969, 4
        %v1972 = vshll.u32 %v1921, 16
        %v1974 = vrot.slane %v1972, 5
        %v1975 = vsel %vm1551, %v1970, %v1974
        %v1977 = vshrl.u32 %v1922, 16
        %v1979 = vrot.slane %v1977, 4
        %v1980 = vshll.u32 %v1922, 16
        %v1982 = vrot.slane %v1980, 5
        %v1983 = vor.u32 %v1979, %v1982
        %v1984 = vrot.slane %v1983, 4
        %v1986 = vshll.u32 %v1923, 16
        %v1988 = vrot.slane %v1986, 5
        %v1989 = vsel %vm1551, %v1984, %v1988
        %v1990 = vshrl.u32 %v1923, 16
        %v1992 = vrot.slane %v1990, 4
        %v1993 = vor.u32 %v1992, %v1988
        %v1994 = vrot.slane %v1993, 4
        %v1996 = vshll.u32 %v1924, 16
        %v1998 = vrot.slane %v1996, 5
        %v1999 = vsel %vm1551, %v1994, %v1998
        %v2001 = vshrl.u32 %v1925, 16
        %v2003 = vrot.slane %v2001, 4
        %v2004 = vshll.u32 %v1925, 16
        %v2006 = vrot.slane %v2004, 5
        %v2007 = vor.u32 %v2003, %v2006
        %v2008 = vrot.slane %v2007, 4
        %v2010 = vshll.u32 %v1926, 16
        %v2012 = vrot.slane %v2010, 5
        %v2013 = vsel %vm1551, %v2008, %v2012
        %v2014 = vshrl.u32 %v1926, 16
        %v2016 = vrot.slane %v2014, 4
        %v2017 = vor.u32 %v2016, %v2012
        %v2018 = vrot.slane %v2017, 4
        %v2020 = vshll.u32 %v1927, 16
        %v2022 = vrot.slane %v2020, 5
        %v2023 = vsel %vm1551, %v2018, %v2022
        %2024 = vrot.lane.b32.xlu0 %v1941, 127
        %v2025 = vpop.permute.xlu0 %2024
        %2026 = vrot.lane.b32.xlu0 %v1951, 127
        %v2027 = vpop.permute.xlu0 %2026
        %2028 = vrot.lane.b32.xlu0 %v1965, 127
        %v2029 = vpop.permute.xlu0 %2028
        %2030 = vrot.lane.b32.xlu0 %v1975, 127
        %v2031 = vpop.permute.xlu0 %2030
        %2032 = vrot.lane.b32.xlu0 %v1989, 127
        %v2033 = vpop.permute.xlu0 %2032
        %2034 = vrot.lane.b32.xlu0 %v1999, 127
        %v2035 = vpop.permute.xlu0 %2034
        %2036 = vrot.lane.b32.xlu0 %v2013, 127
        %v2037 = vpop.permute.xlu0 %2036
        %2038 = vrot.lane.b32.xlu0 %v2023, 127
        %v2039 = vpop.permute.xlu0 %2038
        %v2042 = vpack.i.b16 %v2029, %v2025
        %v2043 = vshrl.u32 %v2025, 16
        %v2044 = vshrl.u32 %v2029, 16
        %v2045 = vpack.i.b16 %v2044, %v2043
        %v2048 = vpack.i.b16 %v2037, %v2033
        %v2049 = vshrl.u32 %v2033, 16
        %v2050 = vshrl.u32 %v2037, 16
        %v2051 = vpack.i.b16 %v2050, %v2049
        %v2054 = vpack.i.b16 %v2031, %v2027
        %v2055 = vshrl.u32 %v2027, 16
        %v2056 = vshrl.u32 %v2031, 16
        %v2057 = vpack.i.b16 %v2056, %v2055
        %v2060 = vpack.i.b16 %v2039, %v2035
        %v2061 = vshrl.u32 %v2035, 16
        %v2062 = vshrl.u32 %v2039, 16
        %v2063 = vpack.i.b16 %v2062, %v2061
        %v2066 = vunpack.c.l.s4 1983009808
        %v2067 = vunpack.c.0.s8 %v2066
        %v2068 = vlaneseq
        %v2069 = vshrl.u32 %v2068, 7
        %v2070 = vsub.s32 %v2067, %v2069
        %v2071 = vrot.slane %v2042, %v2070
        %v2074 = vunpack.c.l.s4 1983009808
        %v2075 = vunpack.c.0.s8 %v2074
        %v2076 = vlaneseq
        %v2077 = vshrl.u32 %v2076, 7
        %v2078 = vsub.s32 %v2075, %v2077
        %v2079 = vrot.slane %v2048, %v2078
        %v2080 = vcombine.low %v2071, %v2079
        %v2081 = vcombine.high %v2071, %v2079
        %v2083 = vunpack.c.l.s4 1934713408
        %v2084 = vunpack.c.0.s8 %v2083
        %v2085 = vlaneseq
        %v2086 = vshrl.u32 %v2085, 7
        %v2087 = vsub.s32 %v2084, %v2086
        %v2088 = vrot.slane %v2080, %v2087
        %v2090 = vunpack.c.l.s4 1934713408
        %v2091 = vunpack.c.0.s8 %v2090
        %v2092 = vlaneseq
        %v2093 = vshrl.u32 %v2092, 7
        %v2094 = vsub.s32 %v2091, %v2093
        %v2095 = vrot.slane %v2081, %v2094
        %v2096 = vcombine.high %v2088, 0
        %v2097 = vcombine.high %v2095, 0
        %v2100 = vunpack.c.l.s4 1983009808
        %v2101 = vunpack.c.0.s8 %v2100
        %v2102 = vlaneseq
        %v2103 = vshrl.u32 %v2102, 7
        %v2104 = vsub.s32 %v2101, %v2103
        %v2105 = vrot.slane %v2045, %v2104
        %v2108 = vunpack.c.l.s4 1983009808
        %v2109 = vunpack.c.0.s8 %v2108
        %v2110 = vlaneseq
        %v2111 = vshrl.u32 %v2110, 7
        %v2112 = vsub.s32 %v2109, %v2111
        %v2113 = vrot.slane %v2051, %v2112
        %v2114 = vcombine.low %v2105, %v2113
        %v2115 = vcombine.high %v2105, %v2113
        %v2117 = vunpack.c.l.s4 1934713408
        %v2118 = vunpack.c.0.s8 %v2117
        %v2119 = vlaneseq
        %v2120 = vshrl.u32 %v2119, 7
        %v2121 = vsub.s32 %v2118, %v2120
        %v2122 = vrot.slane %v2114, %v2121
        %v2124 = vunpack.c.l.s4 1934713408
        %v2125 = vunpack.c.0.s8 %v2124
        %v2126 = vlaneseq
        %v2127 = vshrl.u32 %v2126, 7
        %v2128 = vsub.s32 %v2125, %v2127
        %v2129 = vrot.slane %v2115, %v2128
        %v2130 = vcombine.high %v2122, 0
        %v2131 = vcombine.high %v2129, 0
        %v2134 = vunpack.c.l.s4 1983009808
        %v2135 = vunpack.c.0.s8 %v2134
        %v2136 = vlaneseq
        %v2137 = vshrl.u32 %v2136, 7
        %v2138 = vsub.s32 %v2135, %v2137
        %v2139 = vrot.slane %v2054, %v2138
        %v2142 = vunpack.c.l.s4 1983009808
        %v2143 = vunpack.c.0.s8 %v2142
        %v2144 = vlaneseq
        %v2145 = vshrl.u32 %v2144, 7
        %v2146 = vsub.s32 %v2143, %v2145
        %v2147 = vrot.slane %v2060, %v2146
        %v2148 = vcombine.low %v2139, %v2147
        %v2149 = vcombine.high %v2139, %v2147
        %v2151 = vunpack.c.l.s4 1934713408
        %v2152 = vunpack.c.0.s8 %v2151
        %v2153 = vlaneseq
        %v2154 = vshrl.u32 %v2153, 7
        %v2155 = vsub.s32 %v2152, %v2154
        %v2156 = vrot.slane %v2148, %v2155
        %v2158 = vunpack.c.l.s4 1934713408
        %v2159 = vunpack.c.0.s8 %v2158
        %v2160 = vlaneseq
        %v2161 = vshrl.u32 %v2160, 7
        %v2162 = vsub.s32 %v2159, %v2161
        %v2163 = vrot.slane %v2149, %v2162
        %v2164 = vcombine.high %v2156, 0
        %v2165 = vcombine.high %v2163, 0
        %v2168 = vunpack.c.l.s4 1983009808
        %v2169 = vunpack.c.0.s8 %v2168
        %v2170 = vlaneseq
        %v2171 = vshrl.u32 %v2170, 7
        %v2172 = vsub.s32 %v2169, %v2171
        %v2173 = vrot.slane %v2057, %v2172
        %v2176 = vunpack.c.l.s4 1983009808
        %v2177 = vunpack.c.0.s8 %v2176
        %v2178 = vlaneseq
        %v2179 = vshrl.u32 %v2178, 7
        %v2180 = vsub.s32 %v2177, %v2179
        %v2181 = vrot.slane %v2063, %v2180
        %v2182 = vcombine.low %v2173, %v2181
        %v2183 = vcombine.high %v2173, %v2181
        %v2185 = vunpack.c.l.s4 1934713408
        %v2186 = vunpack.c.0.s8 %v2185
        %v2187 = vlaneseq
        %v2188 = vshrl.u32 %v2187, 7
        %v2189 = vsub.s32 %v2186, %v2188
        %v2190 = vrot.slane %v2182, %v2189
        %v2192 = vunpack.c.l.s4 1934713408
        %v2193 = vunpack.c.0.s8 %v2192
        %v2194 = vlaneseq
        %v2195 = vshrl.u32 %v2194, 7
        %v2196 = vsub.s32 %v2193, %v2195
        %v2197 = vrot.slane %v2183, %v2196
        %v2198 = vcombine.high %v2190, 0
        %v2199 = vcombine.high %v2197, 0
        %v2201 = vunpack.c.l.b16 %v2122
        %v2202 = vpack.c.b16 %v2201, %v2201
        %2203 = vrot.lane.b32.xlu0 %v2202, 16
        %v2204 = vpop.permute.xlu0 %2203
        %v2206 = vunpack.c.l.b16 %v2096
        %v2207 = vpack.c.b16 %v2206, %v2206
        %2208 = vrot.lane.b32.xlu0 %v2207, 32
        %v2209 = vpop.permute.xlu0 %2208
        %v2211 = vunpack.c.l.b16 %v2130
        %v2212 = vpack.c.b16 %v2211, %v2211
        %2213 = vrot.lane.b32.xlu0 %v2212, 48
        %v2214 = vpop.permute.xlu0 %2213
        %v2216 = vunpack.c.l.b16 %v2095
        %v2217 = vpack.c.b16 %v2216, %v2216
        %2218 = vrot.lane.b32.xlu0 %v2217, 64
        %v2219 = vpop.permute.xlu0 %2218
        %v2221 = vunpack.c.l.b16 %v2129
        %v2222 = vpack.c.b16 %v2221, %v2221
        %2223 = vrot.lane.b32.xlu0 %v2222, 80
        %v2224 = vpop.permute.xlu0 %2223
        %v2226 = vunpack.c.l.b16 %v2097
        %v2227 = vpack.c.b16 %v2226, %v2226
        %2228 = vrot.lane.b32.xlu0 %v2227, 96
        %v2229 = vpop.permute.xlu0 %2228
        %v2231 = vunpack.c.l.b16 %v2131
        %v2232 = vpack.c.b16 %v2231, %v2231
        %2233 = vrot.lane.b32.xlu0 %v2232, 112
        %v2234 = vpop.permute.xlu0 %2233
        %v2236 = vunpack.c.l.b16 %v2190
        %v2237 = vpack.c.b16 %v2236, %v2236
        %2238 = vrot.lane.b32.xlu0 %v2237, 16
        %v2239 = vpop.permute.xlu0 %2238
        %v2241 = vunpack.c.l.b16 %v2164
        %v2242 = vpack.c.b16 %v2241, %v2241
        %2243 = vrot.lane.b32.xlu0 %v2242, 32
        %v2244 = vpop.permute.xlu0 %2243
        %v2246 = vunpack.c.l.b16 %v2198
        %v2247 = vpack.c.b16 %v2246, %v2246
        %2248 = vrot.lane.b32.xlu0 %v2247, 48
        %v2249 = vpop.permute.xlu0 %2248
        %v2251 = vunpack.c.l.b16 %v2163
        %v2252 = vpack.c.b16 %v2251, %v2251
        %2253 = vrot.lane.b32.xlu0 %v2252, 64
        %v2254 = vpop.permute.xlu0 %2253
        %v2256 = vunpack.c.l.b16 %v2197
        %v2257 = vpack.c.b16 %v2256, %v2256
        %2258 = vrot.lane.b32.xlu0 %v2257, 80
        %v2259 = vpop.permute.xlu0 %2258
        %v2261 = vunpack.c.l.b16 %v2165
        %v2262 = vpack.c.b16 %v2261, %v2261
        %2263 = vrot.lane.b32.xlu0 %v2262, 96
        %v2264 = vpop.permute.xlu0 %2263
        %v2266 = vunpack.c.l.b16 %v2199
        %v2267 = vpack.c.b16 %v2266, %v2266
        %2268 = vrot.lane.b32.xlu0 %v2267, 112
        %v2269 = vpop.permute.xlu0 %2268
        %v2272 = vsel %vm894, %v2088, %v2204
        %v2274 = vsel %vm898, %v2272, %v2209
        %v2276 = vsel %vm901, %v2274, %v2214
        %v2278 = vsel %vm904, %v2276, %v2219
        %v2280 = vsel %vm907, %v2278, %v2224
        %v2282 = vsel %vm910, %v2280, %v2229
        %v2284 = vsel %vm913, %v2282, %v2234
        %v2287 = vsel %vm894, %v2156, %v2239
        %v2289 = vsel %vm898, %v2287, %v2244
        %v2291 = vsel %vm901, %v2289, %v2249
        %v2293 = vsel %vm904, %v2291, %v2254
        %v2295 = vsel %vm907, %v2293, %v2259
        %v2297 = vsel %vm910, %v2295, %v2264
        %v2299 = vsel %vm913, %v2297, %v2269
        %v2302 = vunpack.c.l.b16 %v2284
        %v2303 = vunpack.c.l.b16 %v2299
        %v2304 = vpack.c.b16 %v2303, %v2302
        %2306 = vst [vmem:[#allocation3 + $0x10] sm:$0x33] %v2304
        %v2307 = vld [vmem:[#allocation2] sm:$0xf]
        %v2308 = vld [vmem:[#allocation2 + $0x4] sm:$0xf]
        %v2309 = vld [vmem:[#allocation2 + $0x8] sm:$0x1]
        %v2310 = vld [vmem:[#allocation2 + $0xc] sm:$0xf]
        %v2311 = vld [vmem:[#allocation2 + $0x10] sm:$0xf]
        %v2312 = vld [vmem:[#allocation2 + $0x14] sm:$0x1]
        %v2313 = vld [vmem:[#allocation2 + $0x18] sm:$0xf]
        %v2314 = vld [vmem:[#allocation2 + $0x1c] sm:$0xf]
        %v2315 = vld [vmem:[#allocation2 + $0x20] sm:$0x1]
        %v2316 = vld [vmem:[#allocation2 + $0x24] sm:$0xf]
        %v2317 = vld [vmem:[#allocation2 + $0x28] sm:$0xf]
        %v2318 = vld [vmem:[#allocation2 + $0x2c] sm:$0x1]
        %v2320 = vshrl.u32 %v2307, 16
        %v2322 = vrot.slane %v2320, 4
        %v2323 = vshll.u32 %v2307, 16
        %v2325 = vrot.slane %v2323, 5
        %v2326 = vor.u32 %v2322, %v2325
        %v2327 = vrot.slane %v2326, 4
        %v2329 = vshll.u32 %v2308, 16
        %v2331 = vrot.slane %v2329, 5
        %v2332 = vsel %vm1551, %v2327, %v2331
        %v2333 = vshrl.u32 %v2308, 16
        %v2335 = vrot.slane %v2333, 4
        %v2336 = vor.u32 %v2335, %v2331
        %v2337 = vrot.slane %v2336, 4
        %v2339 = vshll.u32 %v2309, 16
        %v2341 = vrot.slane %v2339, 5
        %v2342 = vsel %vm1551, %v2337, %v2341
        %v2344 = vshrl.u32 %v2310, 16
        %v2346 = vrot.slane %v2344, 4
        %v2347 = vshll.u32 %v2310, 16
        %v2349 = vrot.slane %v2347, 5
        %v2350 = vor.u32 %v2346, %v2349
        %v2351 = vrot.slane %v2350, 4
        %v2353 = vshll.u32 %v2311, 16
        %v2355 = vrot.slane %v2353, 5
        %v2356 = vsel %vm1551, %v2351, %v2355
        %v2357 = vshrl.u32 %v2311, 16
        %v2359 = vrot.slane %v2357, 4
        %v2360 = vor.u32 %v2359, %v2355
        %v2361 = vrot.slane %v2360, 4
        %v2363 = vshll.u32 %v2312, 16
        %v2365 = vrot.slane %v2363, 5
        %v2366 = vsel %vm1551, %v2361, %v2365
        %v2368 = vshrl.u32 %v2313, 16
        %v2370 = vrot.slane %v2368, 4
        %v2371 = vshll.u32 %v2313, 16
        %v2373 = vrot.slane %v2371, 5
        %v2374 = vor.u32 %v2370, %v2373
        %v2375 = vrot.slane %v2374, 4
        %v2377 = vshll.u32 %v2314, 16
        %v2379 = vrot.slane %v2377, 5
        %v2380 = vsel %vm1551, %v2375, %v2379
        %v2381 = vshrl.u32 %v2314, 16
        %v2383 = vrot.slane %v2381, 4
        %v2384 = vor.u32 %v2383, %v2379
        %v2385 = vrot.slane %v2384, 4
        %v2387 = vshll.u32 %v2315, 16
        %v2389 = vrot.slane %v2387, 5
        %v2390 = vsel %vm1551, %v2385, %v2389
        %v2392 = vshrl.u32 %v2316, 16
        %v2394 = vrot.slane %v2392, 4
        %v2395 = vshll.u32 %v2316, 16
        %v2397 = vrot.slane %v2395, 5
        %v2398 = vor.u32 %v2394, %v2397
        %v2399 = vrot.slane %v2398, 4
        %v2401 = vshll.u32 %v2317, 16
        %v2403 = vrot.slane %v2401, 5
        %v2404 = vsel %vm1551, %v2399, %v2403
        %v2405 = vshrl.u32 %v2317, 16
        %v2407 = vrot.slane %v2405, 4
        %v2408 = vor.u32 %v2407, %v2403
        %v2409 = vrot.slane %v2408, 4
        %v2411 = vshll.u32 %v2318, 16
        %v2413 = vrot.slane %v2411, 5
        %v2414 = vsel %vm1551, %v2409, %v2413
        %2415 = vrot.lane.b32.xlu0 %v2332, 126
        %v2416 = vpop.permute.xlu0 %2415
        %2417 = vrot.lane.b32.xlu0 %v2342, 126
        %v2418 = vpop.permute.xlu0 %2417
        %2419 = vrot.lane.b32.xlu0 %v2356, 126
        %v2420 = vpop.permute.xlu0 %2419
        %2421 = vrot.lane.b32.xlu0 %v2366, 126
        %v2422 = vpop.permute.xlu0 %2421
        %2423 = vrot.lane.b32.xlu0 %v2380, 126
        %v2424 = vpop.permute.xlu0 %2423
        %2425 = vrot.lane.b32.xlu0 %v2390, 126
        %v2426 = vpop.permute.xlu0 %2425
        %2427 = vrot.lane.b32.xlu0 %v2404, 126
        %v2428 = vpop.permute.xlu0 %2427
        %2429 = vrot.lane.b32.xlu0 %v2414, 126
        %v2430 = vpop.permute.xlu0 %2429
        %v2433 = vpack.i.b16 %v2420, %v2416
        %v2434 = vshrl.u32 %v2416, 16
        %v2435 = vshrl.u32 %v2420, 16
        %v2436 = vpack.i.b16 %v2435, %v2434
        %v2439 = vpack.i.b16 %v2428, %v2424
        %v2440 = vshrl.u32 %v2424, 16
        %v2441 = vshrl.u32 %v2428, 16
        %v2442 = vpack.i.b16 %v2441, %v2440
        %v2445 = vpack.i.b16 %v2422, %v2418
        %v2446 = vshrl.u32 %v2418, 16
        %v2447 = vshrl.u32 %v2422, 16
        %v2448 = vpack.i.b16 %v2447, %v2446
        %v2451 = vpack.i.b16 %v2430, %v2426
        %v2452 = vshrl.u32 %v2426, 16
        %v2453 = vshrl.u32 %v2430, 16
        %v2454 = vpack.i.b16 %v2453, %v2452
        %v2457 = vunpack.c.l.s4 1983009808
        %v2458 = vunpack.c.0.s8 %v2457
        %v2459 = vlaneseq
        %v2460 = vshrl.u32 %v2459, 7
        %v2461 = vsub.s32 %v2458, %v2460
        %v2462 = vrot.slane %v2433, %v2461
        %v2465 = vunpack.c.l.s4 1983009808
        %v2466 = vunpack.c.0.s8 %v2465
        %v2467 = vlaneseq
        %v2468 = vshrl.u32 %v2467, 7
        %v2469 = vsub.s32 %v2466, %v2468
        %v2470 = vrot.slane %v2439, %v2469
        %v2471 = vcombine.low %v2462, %v2470
        %v2472 = vcombine.high %v2462, %v2470
        %v2474 = vunpack.c.l.s4 1934713408
        %v2475 = vunpack.c.0.s8 %v2474
        %v2476 = vlaneseq
        %v2477 = vshrl.u32 %v2476, 7
        %v2478 = vsub.s32 %v2475, %v2477
        %v2479 = vrot.slane %v2471, %v2478
        %v2481 = vunpack.c.l.s4 1934713408
        %v2482 = vunpack.c.0.s8 %v2481
        %v2483 = vlaneseq
        %v2484 = vshrl.u32 %v2483, 7
        %v2485 = vsub.s32 %v2482, %v2484
        %v2486 = vrot.slane %v2472, %v2485
        %v2487 = vcombine.high %v2479, 0
        %v2488 = vcombine.high %v2486, 0
        %v2491 = vunpack.c.l.s4 1983009808
        %v2492 = vunpack.c.0.s8 %v2491
        %v2493 = vlaneseq
        %v2494 = vshrl.u32 %v2493, 7
        %v2495 = vsub.s32 %v2492, %v2494
        %v2496 = vrot.slane %v2436, %v2495
        %v2499 = vunpack.c.l.s4 1983009808
        %v2500 = vunpack.c.0.s8 %v2499
        %v2501 = vlaneseq
        %v2502 = vshrl.u32 %v2501, 7
        %v2503 = vsub.s32 %v2500, %v2502
        %v2504 = vrot.slane %v2442, %v2503
        %v2505 = vcombine.low %v2496, %v2504
        %v2506 = vcombine.high %v2496, %v2504
        %v2508 = vunpack.c.l.s4 1934713408
        %v2509 = vunpack.c.0.s8 %v2508
        %v2510 = vlaneseq
        %v2511 = vshrl.u32 %v2510, 7
        %v2512 = vsub.s32 %v2509, %v2511
        %v2513 = vrot.slane %v2505, %v2512
        %v2515 = vunpack.c.l.s4 1934713408
        %v2516 = vunpack.c.0.s8 %v2515
        %v2517 = vlaneseq
        %v2518 = vshrl.u32 %v2517, 7
        %v2519 = vsub.s32 %v2516, %v2518
        %v2520 = vrot.slane %v2506, %v2519
        %v2521 = vcombine.high %v2513, 0
        %v2522 = vcombine.high %v2520, 0
        %v2525 = vunpack.c.l.s4 1983009808
        %v2526 = vunpack.c.0.s8 %v2525
        %v2527 = vlaneseq
        %v2528 = vshrl.u32 %v2527, 7
        %v2529 = vsub.s32 %v2526, %v2528
        %v2530 = vrot.slane %v2445, %v2529
        %v2533 = vunpack.c.l.s4 1983009808
        %v2534 = vunpack.c.0.s8 %v2533
        %v2535 = vlaneseq
        %v2536 = vshrl.u32 %v2535, 7
        %v2537 = vsub.s32 %v2534, %v2536
        %v2538 = vrot.slane %v2451, %v2537
        %v2539 = vcombine.low %v2530, %v2538
        %v2540 = vcombine.high %v2530, %v2538
        %v2542 = vunpack.c.l.s4 1934713408
        %v2543 = vunpack.c.0.s8 %v2542
        %v2544 = vlaneseq
        %v2545 = vshrl.u32 %v2544, 7
        %v2546 = vsub.s32 %v2543, %v2545
        %v2547 = vrot.slane %v2539, %v2546
        %v2549 = vunpack.c.l.s4 1934713408
        %v2550 = vunpack.c.0.s8 %v2549
        %v2551 = vlaneseq
        %v2552 = vshrl.u32 %v2551, 7
        %v2553 = vsub.s32 %v2550, %v2552
        %v2554 = vrot.slane %v2540, %v2553
        %v2555 = vcombine.high %v2547, 0
        %v2556 = vcombine.high %v2554, 0
        %v2559 = vunpack.c.l.s4 1983009808
        %v2560 = vunpack.c.0.s8 %v2559
        %v2561 = vlaneseq
        %v2562 = vshrl.u32 %v2561, 7
        %v2563 = vsub.s32 %v2560, %v2562
        %v2564 = vrot.slane %v2448, %v2563
        %v2567 = vunpack.c.l.s4 1983009808
        %v2568 = vunpack.c.0.s8 %v2567
        %v2569 = vlaneseq
        %v2570 = vshrl.u32 %v2569, 7
        %v2571 = vsub.s32 %v2568, %v2570
        %v2572 = vrot.slane %v2454, %v2571
        %v2573 = vcombine.low %v2564, %v2572
        %v2574 = vcombine.high %v2564, %v2572
        %v2576 = vunpack.c.l.s4 1934713408
        %v2577 = vunpack.c.0.s8 %v2576
        %v2578 = vlaneseq
        %v2579 = vshrl.u32 %v2578, 7
        %v2580 = vsub.s32 %v2577, %v2579
        %v2581 = vrot.slane %v2573, %v2580
        %v2583 = vunpack.c.l.s4 1934713408
        %v2584 = vunpack.c.0.s8 %v2583
        %v2585 = vlaneseq
        %v2586 = vshrl.u32 %v2585, 7
        %v2587 = vsub.s32 %v2584, %v2586
        %v2588 = vrot.slane %v2574, %v2587
        %v2589 = vcombine.high %v2581, 0
        %v2590 = vcombine.high %v2588, 0
        %v2592 = vunpack.c.l.b16 %v2513
        %v2593 = vpack.c.b16 %v2592, %v2592
        %2594 = vrot.lane.b32.xlu0 %v2593, 16
        %v2595 = vpop.permute.xlu0 %2594
        %v2597 = vunpack.c.l.b16 %v2487
        %v2598 = vpack.c.b16 %v2597, %v2597
        %2599 = vrot.lane.b32.xlu0 %v2598, 32
        %v2600 = vpop.permute.xlu0 %2599
        %v2602 = vunpack.c.l.b16 %v2521
        %v2603 = vpack.c.b16 %v2602, %v2602
        %2604 = vrot.lane.b32.xlu0 %v2603, 48
        %v2605 = vpop.permute.xlu0 %2604
        %v2607 = vunpack.c.l.b16 %v2486
        %v2608 = vpack.c.b16 %v2607, %v2607
        %2609 = vrot.lane.b32.xlu0 %v2608, 64
        %v2610 = vpop.permute.xlu0 %2609
        %v2612 = vunpack.c.l.b16 %v2520
        %v2613 = vpack.c.b16 %v2612, %v2612
        %2614 = vrot.lane.b32.xlu0 %v2613, 80
        %v2615 = vpop.permute.xlu0 %2614
        %v2617 = vunpack.c.l.b16 %v2488
        %v2618 = vpack.c.b16 %v2617, %v2617
        %2619 = vrot.lane.b32.xlu0 %v2618, 96
        %v2620 = vpop.permute.xlu0 %2619
        %v2622 = vunpack.c.l.b16 %v2522
        %v2623 = vpack.c.b16 %v2622, %v2622
        %2624 = vrot.lane.b32.xlu0 %v2623, 112
        %v2625 = vpop.permute.xlu0 %2624
        %v2627 = vunpack.c.l.b16 %v2581
        %v2628 = vpack.c.b16 %v2627, %v2627
        %2629 = vrot.lane.b32.xlu0 %v2628, 16
        %v2630 = vpop.permute.xlu0 %2629
        %v2632 = vunpack.c.l.b16 %v2555
        %v2633 = vpack.c.b16 %v2632, %v2632
        %2634 = vrot.lane.b32.xlu0 %v2633, 32
        %v2635 = vpop.permute.xlu0 %2634
        %v2637 = vunpack.c.l.b16 %v2589
        %v2638 = vpack.c.b16 %v2637, %v2637
        %2639 = vrot.lane.b32.xlu0 %v2638, 48
        %v2640 = vpop.permute.xlu0 %2639
        %v2642 = vunpack.c.l.b16 %v2554
        %v2643 = vpack.c.b16 %v2642, %v2642
        %2644 = vrot.lane.b32.xlu0 %v2643, 64
        %v2645 = vpop.permute.xlu0 %2644
        %v2647 = vunpack.c.l.b16 %v2588
        %v2648 = vpack.c.b16 %v2647, %v2647
        %2649 = vrot.lane.b32.xlu0 %v2648, 80
        %v2650 = vpop.permute.xlu0 %2649
        %v2652 = vunpack.c.l.b16 %v2556
        %v2653 = vpack.c.b16 %v2652, %v2652
        %2654 = vrot.lane.b32.xlu0 %v2653, 96
        %v2655 = vpop.permute.xlu0 %2654
        %v2657 = vunpack.c.l.b16 %v2590
        %v2658 = vpack.c.b16 %v2657, %v2657
        %2659 = vrot.lane.b32.xlu0 %v2658, 112
        %v2660 = vpop.permute.xlu0 %2659
        %v2663 = vsel %vm894, %v2479, %v2595
        %v2665 = vsel %vm898, %v2663, %v2600
        %v2667 = vsel %vm901, %v2665, %v2605
        %v2669 = vsel %vm904, %v2667, %v2610
        %v2671 = vsel %vm907, %v2669, %v2615
        %v2673 = vsel %vm910, %v2671, %v2620
        %v2675 = vsel %vm913, %v2673, %v2625
        %v2678 = vsel %vm894, %v2547, %v2630
        %v2680 = vsel %vm898, %v2678, %v2635
        %v2682 = vsel %vm901, %v2680, %v2640
        %v2684 = vsel %vm904, %v2682, %v2645
        %v2686 = vsel %vm907, %v2684, %v2650
        %v2688 = vsel %vm910, %v2686, %v2655
        %v2690 = vsel %vm913, %v2688, %v2660
        %v2693 = vunpack.c.l.b16 %v2675
        %v2694 = vunpack.c.l.b16 %v2690
        %v2695 = vpack.c.b16 %v2694, %v2693
        %v2696 = vrot.slane %v2695, 6
        %2698 = vst [vmem:[#allocation3 + $0x10] sm:$0xcc] %v2696
        %v2699 = vld [vmem:[#allocation2] sm:$0xe]
        %v2700 = vld [vmem:[#allocation2 + $0x4] sm:$0xf]
        %v2701 = vld [vmem:[#allocation2 + $0x8] sm:$0x1]
        %v2702 = vld [vmem:[#allocation2 + $0xc] sm:$0xe]
        %v2703 = vld [vmem:[#allocation2 + $0x10] sm:$0xf]
        %v2704 = vld [vmem:[#allocation2 + $0x14] sm:$0x1]
        %v2705 = vld [vmem:[#allocation2 + $0x18] sm:$0xe]
        %v2706 = vld [vmem:[#allocation2 + $0x1c] sm:$0xf]
        %v2707 = vld [vmem:[#allocation2 + $0x20] sm:$0x1]
        %v2708 = vld [vmem:[#allocation2 + $0x24] sm:$0xe]
        %v2709 = vld [vmem:[#allocation2 + $0x28] sm:$0xf]
        %v2710 = vld [vmem:[#allocation2 + $0x2c] sm:$0x1]
        %vm2723 = vcmask 1042432
        %vm2724 = vcmask 1046532
        %vm2725 = vmor %vm2723, %vm2724
        %v2726 = vrot.slane %v2699, 5
        %v2727 = vrot.slane %v2726, 4
        %v2728 = vrot.slane %v2700, 5
        %v2729 = vsel %vm2725, %v2727, %v2728
        %v2730 = vrot.slane %v2728, 4
        %v2731 = vrot.slane %v2701, 5
        %v2732 = vsel %vm2725, %v2730, %v2731
        %v2733 = vrot.slane %v2702, 5
        %v2734 = vrot.slane %v2733, 4
        %v2735 = vrot.slane %v2703, 5
        %v2736 = vsel %vm2725, %v2734, %v2735
        %v2737 = vrot.slane %v2735, 4
        %v2738 = vrot.slane %v2704, 5
        %v2739 = vsel %vm2725, %v2737, %v2738
        %v2740 = vrot.slane %v2705, 5
        %v2741 = vrot.slane %v2740, 4
        %v2742 = vrot.slane %v2706, 5
        %v2743 = vsel %vm2725, %v2741, %v2742
        %v2744 = vrot.slane %v2742, 4
        %v2745 = vrot.slane %v2707, 5
        %v2746 = vsel %vm2725, %v2744, %v2745
        %v2747 = vrot.slane %v2708, 5
        %v2748 = vrot.slane %v2747, 4
        %v2749 = vrot.slane %v2709, 5
        %v2750 = vsel %vm2725, %v2748, %v2749
        %v2751 = vrot.slane %v2749, 4
        %v2752 = vrot.slane %v2710, 5
        %v2753 = vsel %vm2725, %v2751, %v2752
        %v2756 = vpack.i.b16 %v2736, %v2729
        %v2757 = vshrl.u32 %v2729, 16
        %v2758 = vshrl.u32 %v2736, 16
        %v2759 = vpack.i.b16 %v2758, %v2757
        %v2762 = vpack.i.b16 %v2750, %v2743
        %v2763 = vshrl.u32 %v2743, 16
        %v2764 = vshrl.u32 %v2750, 16
        %v2765 = vpack.i.b16 %v2764, %v2763
        %v2768 = vpack.i.b16 %v2739, %v2732
        %v2769 = vshrl.u32 %v2732, 16
        %v2770 = vshrl.u32 %v2739, 16
        %v2771 = vpack.i.b16 %v2770, %v2769
        %v2774 = vpack.i.b16 %v2753, %v2746
        %v2775 = vshrl.u32 %v2746, 16
        %v2776 = vshrl.u32 %v2753, 16
        %v2777 = vpack.i.b16 %v2776, %v2775
        %v2780 = vunpack.c.l.s4 1983009808
        %v2781 = vunpack.c.0.s8 %v2780
        %v2782 = vlaneseq
        %v2783 = vshrl.u32 %v2782, 7
        %v2784 = vsub.s32 %v2781, %v2783
        %v2785 = vrot.slane %v2756, %v2784
        %v2788 = vunpack.c.l.s4 1983009808
        %v2789 = vunpack.c.0.s8 %v2788
        %v2790 = vlaneseq
        %v2791 = vshrl.u32 %v2790, 7
        %v2792 = vsub.s32 %v2789, %v2791
        %v2793 = vrot.slane %v2762, %v2792
        %v2794 = vcombine.low %v2785, %v2793
        %v2795 = vcombine.high %v2785, %v2793
        %v2797 = vunpack.c.l.s4 1934713408
        %v2798 = vunpack.c.0.s8 %v2797
        %v2799 = vlaneseq
        %v2800 = vshrl.u32 %v2799, 7
        %v2801 = vsub.s32 %v2798, %v2800
        %v2802 = vrot.slane %v2794, %v2801
        %v2804 = vunpack.c.l.s4 1934713408
        %v2805 = vunpack.c.0.s8 %v2804
        %v2806 = vlaneseq
        %v2807 = vshrl.u32 %v2806, 7
        %v2808 = vsub.s32 %v2805, %v2807
        %v2809 = vrot.slane %v2795, %v2808
        %v2810 = vcombine.high %v2802, 0
        %v2811 = vcombine.high %v2809, 0
        %v2814 = vunpack.c.l.s4 1983009808
        %v2815 = vunpack.c.0.s8 %v2814
        %v2816 = vlaneseq
        %v2817 = vshrl.u32 %v2816, 7
        %v2818 = vsub.s32 %v2815, %v2817
        %v2819 = vrot.slane %v2759, %v2818
        %v2822 = vunpack.c.l.s4 1983009808
        %v2823 = vunpack.c.0.s8 %v2822
        %v2824 = vlaneseq
        %v2825 = vshrl.u32 %v2824, 7
        %v2826 = vsub.s32 %v2823, %v2825
        %v2827 = vrot.slane %v2765, %v2826
        %v2828 = vcombine.low %v2819, %v2827
        %v2829 = vcombine.high %v2819, %v2827
        %v2831 = vunpack.c.l.s4 1934713408
        %v2832 = vunpack.c.0.s8 %v2831
        %v2833 = vlaneseq
        %v2834 = vshrl.u32 %v2833, 7
        %v2835 = vsub.s32 %v2832, %v2834
        %v2836 = vrot.slane %v2828, %v2835
        %v2838 = vunpack.c.l.s4 1934713408
        %v2839 = vunpack.c.0.s8 %v2838
        %v2840 = vlaneseq
        %v2841 = vshrl.u32 %v2840, 7
        %v2842 = vsub.s32 %v2839, %v2841
        %v2843 = vrot.slane %v2829, %v2842
        %v2844 = vcombine.high %v2836, 0
        %v2845 = vcombine.high %v2843, 0
        %v2848 = vunpack.c.l.s4 1983009808
        %v2849 = vunpack.c.0.s8 %v2848
        %v2850 = vlaneseq
        %v2851 = vshrl.u32 %v2850, 7
        %v2852 = vsub.s32 %v2849, %v2851
        %v2853 = vrot.slane %v2768, %v2852
        %v2856 = vunpack.c.l.s4 1983009808
        %v2857 = vunpack.c.0.s8 %v2856
        %v2858 = vlaneseq
        %v2859 = vshrl.u32 %v2858, 7
        %v2860 = vsub.s32 %v2857, %v2859
        %v2861 = vrot.slane %v2774, %v2860
        %v2862 = vcombine.low %v2853, %v2861
        %v2863 = vcombine.high %v2853, %v2861
        %v2865 = vunpack.c.l.s4 1934713408
        %v2866 = vunpack.c.0.s8 %v2865
        %v2867 = vlaneseq
        %v2868 = vshrl.u32 %v2867, 7
        %v2869 = vsub.s32 %v2866, %v2868
        %v2870 = vrot.slane %v2862, %v2869
        %v2872 = vunpack.c.l.s4 1934713408
        %v2873 = vunpack.c.0.s8 %v2872
        %v2874 = vlaneseq
        %v2875 = vshrl.u32 %v2874, 7
        %v2876 = vsub.s32 %v2873, %v2875
        %v2877 = vrot.slane %v2863, %v2876
        %v2878 = vcombine.high %v2870, 0
        %v2879 = vcombine.high %v2877, 0
        %v2882 = vunpack.c.l.s4 1983009808
        %v2883 = vunpack.c.0.s8 %v2882
        %v2884 = vlaneseq
        %v2885 = vshrl.u32 %v2884, 7
        %v2886 = vsub.s32 %v2883, %v2885
        %v2887 = vrot.slane %v2771, %v2886
        %v2890 = vunpack.c.l.s4 1983009808
        %v2891 = vunpack.c.0.s8 %v2890
        %v2892 = vlaneseq
        %v2893 = vshrl.u32 %v2892, 7
        %v2894 = vsub.s32 %v2891, %v2893
        %v2895 = vrot.slane %v2777, %v2894
        %v2896 = vcombine.low %v2887, %v2895
        %v2897 = vcombine.high %v2887, %v2895
        %v2899 = vunpack.c.l.s4 1934713408
        %v2900 = vunpack.c.0.s8 %v2899
        %v2901 = vlaneseq
        %v2902 = vshrl.u32 %v2901, 7
        %v2903 = vsub.s32 %v2900, %v2902
        %v2904 = vrot.slane %v2896, %v2903
        %v2906 = vunpack.c.l.s4 1934713408
        %v2907 = vunpack.c.0.s8 %v2906
        %v2908 = vlaneseq
        %v2909 = vshrl.u32 %v2908, 7
        %v2910 = vsub.s32 %v2907, %v2909
        %v2911 = vrot.slane %v2897, %v2910
        %v2912 = vcombine.high %v2904, 0
        %v2913 = vcombine.high %v2911, 0
        %v2915 = vunpack.c.l.b16 %v2836
        %v2916 = vpack.c.b16 %v2915, %v2915
        %2917 = vrot.lane.b32.xlu0 %v2916, 16
        %v2918 = vpop.permute.xlu0 %2917
        %v2920 = vunpack.c.l.b16 %v2810
        %v2921 = vpack.c.b16 %v2920, %v2920
        %2922 = vrot.lane.b32.xlu0 %v2921, 32
        %v2923 = vpop.permute.xlu0 %2922
        %v2925 = vunpack.c.l.b16 %v2844
        %v2926 = vpack.c.b16 %v2925, %v2925
        %2927 = vrot.lane.b32.xlu0 %v2926, 48
        %v2928 = vpop.permute.xlu0 %2927
        %v2930 = vunpack.c.l.b16 %v2809
        %v2931 = vpack.c.b16 %v2930, %v2930
        %2932 = vrot.lane.b32.xlu0 %v2931, 64
        %v2933 = vpop.permute.xlu0 %2932
        %v2935 = vunpack.c.l.b16 %v2843
        %v2936 = vpack.c.b16 %v2935, %v2935
        %2937 = vrot.lane.b32.xlu0 %v2936, 80
        %v2938 = vpop.permute.xlu0 %2937
        %v2940 = vunpack.c.l.b16 %v2811
        %v2941 = vpack.c.b16 %v2940, %v2940
        %2942 = vrot.lane.b32.xlu0 %v2941, 96
        %v2943 = vpop.permute.xlu0 %2942
        %v2945 = vunpack.c.l.b16 %v2845
        %v2946 = vpack.c.b16 %v2945, %v2945
        %2947 = vrot.lane.b32.xlu0 %v2946, 112
        %v2948 = vpop.permute.xlu0 %2947
        %v2950 = vunpack.c.l.b16 %v2904
        %v2951 = vpack.c.b16 %v2950, %v2950
        %2952 = vrot.lane.b32.xlu0 %v2951, 16
        %v2953 = vpop.permute.xlu0 %2952
        %v2955 = vunpack.c.l.b16 %v2878
        %v2956 = vpack.c.b16 %v2955, %v2955
        %2957 = vrot.lane.b32.xlu0 %v2956, 32
        %v2958 = vpop.permute.xlu0 %2957
        %v2960 = vunpack.c.l.b16 %v2912
        %v2961 = vpack.c.b16 %v2960, %v2960
        %2962 = vrot.lane.b32.xlu0 %v2961, 48
        %v2963 = vpop.permute.xlu0 %2962
        %v2965 = vunpack.c.l.b16 %v2877
        %v2966 = vpack.c.b16 %v2965, %v2965
        %2967 = vrot.lane.b32.xlu0 %v2966, 64
        %v2968 = vpop.permute.xlu0 %2967
        %v2970 = vunpack.c.l.b16 %v2911
        %v2971 = vpack.c.b16 %v2970, %v2970
        %2972 = vrot.lane.b32.xlu0 %v2971, 80
        %v2973 = vpop.permute.xlu0 %2972
        %v2975 = vunpack.c.l.b16 %v2879
        %v2976 = vpack.c.b16 %v2975, %v2975
        %2977 = vrot.lane.b32.xlu0 %v2976, 96
        %v2978 = vpop.permute.xlu0 %2977
        %v2980 = vunpack.c.l.b16 %v2913
        %v2981 = vpack.c.b16 %v2980, %v2980
        %2982 = vrot.lane.b32.xlu0 %v2981, 112
        %v2983 = vpop.permute.xlu0 %2982
        %v2986 = vsel %vm894, %v2802, %v2918
        %v2988 = vsel %vm898, %v2986, %v2923
        %v2990 = vsel %vm901, %v2988, %v2928
        %v2992 = vsel %vm904, %v2990, %v2933
        %v2994 = vsel %vm907, %v2992, %v2938
        %v2996 = vsel %vm910, %v2994, %v2943
        %v2998 = vsel %vm913, %v2996, %v2948
        %v3001 = vsel %vm894, %v2870, %v2953
        %v3003 = vsel %vm898, %v3001, %v2958
        %v3005 = vsel %vm901, %v3003, %v2963
        %v3007 = vsel %vm904, %v3005, %v2968
        %v3009 = vsel %vm907, %v3007, %v2973
        %v3011 = vsel %vm910, %v3009, %v2978
        %v3013 = vsel %vm913, %v3011, %v2983
        %v3016 = vunpack.c.l.b16 %v2998
        %v3017 = vunpack.c.l.b16 %v3013
        %v3018 = vpack.c.b16 %v3017, %v3016
        %3020 = vst [vmem:[#allocation3 + $0x18] sm:$0x33] %v3018
        %v3021 = vld [vmem:[#allocation2] sm:$0xe]
        %v3022 = vld [vmem:[#allocation2 + $0x4] sm:$0xf]
        %v3023 = vld [vmem:[#allocation2 + $0x8] sm:$0x1]
        %v3024 = vld [vmem:[#allocation2 + $0xc] sm:$0xe]
        %v3025 = vld [vmem:[#allocation2 + $0x10] sm:$0xf]
        %v3026 = vld [vmem:[#allocation2 + $0x14] sm:$0x1]
        %v3027 = vld [vmem:[#allocation2 + $0x18] sm:$0xe]
        %v3028 = vld [vmem:[#allocation2 + $0x1c] sm:$0xf]
        %v3029 = vld [vmem:[#allocation2 + $0x20] sm:$0x1]
        %v3030 = vld [vmem:[#allocation2 + $0x24] sm:$0xe]
        %v3031 = vld [vmem:[#allocation2 + $0x28] sm:$0xf]
        %v3032 = vld [vmem:[#allocation2 + $0x2c] sm:$0x1]
        %v3045 = vrot.slane %v3021, 5
        %v3046 = vrot.slane %v3045, 4
        %v3047 = vrot.slane %v3022, 5
        %v3048 = vsel %vm2725, %v3046, %v3047
        %v3049 = vrot.slane %v3047, 4
        %v3050 = vrot.slane %v3023, 5
        %v3051 = vsel %vm2725, %v3049, %v3050
        %v3052 = vrot.slane %v3024, 5
        %v3053 = vrot.slane %v3052, 4
        %v3054 = vrot.slane %v3025, 5
        %v3055 = vsel %vm2725, %v3053, %v3054
        %v3056 = vrot.slane %v3054, 4
        %v3057 = vrot.slane %v3026, 5
        %v3058 = vsel %vm2725, %v3056, %v3057
        %v3059 = vrot.slane %v3027, 5
        %v3060 = vrot.slane %v3059, 4
        %v3061 = vrot.slane %v3028, 5
        %v3062 = vsel %vm2725, %v3060, %v3061
        %v3063 = vrot.slane %v3061, 4
        %v3064 = vrot.slane %v3029, 5
        %v3065 = vsel %vm2725, %v3063, %v3064
        %v3066 = vrot.slane %v3030, 5
        %v3067 = vrot.slane %v3066, 4
        %v3068 = vrot.slane %v3031, 5
        %v3069 = vsel %vm2725, %v3067, %v3068
        %v3070 = vrot.slane %v3068, 4
        %v3071 = vrot.slane %v3032, 5
        %v3072 = vsel %vm2725, %v3070, %v3071
        %3073 = vrot.lane.b32.xlu0 %v3048, 127
        %v3074 = vpop.permute.xlu0 %3073
        %3075 = vrot.lane.b32.xlu0 %v3051, 127
        %v3076 = vpop.permute.xlu0 %3075
        %3077 = vrot.lane.b32.xlu0 %v3055, 127
        %v3078 = vpop.permute.xlu0 %3077
        %3079 = vrot.lane.b32.xlu0 %v3058, 127
        %v3080 = vpop.permute.xlu0 %3079
        %3081 = vrot.lane.b32.xlu0 %v3062, 127
        %v3082 = vpop.permute.xlu0 %3081
        %3083 = vrot.lane.b32.xlu0 %v3065, 127
        %v3084 = vpop.permute.xlu0 %3083
        %3085 = vrot.lane.b32.xlu0 %v3069, 127
        %v3086 = vpop.permute.xlu0 %3085
        %3087 = vrot.lane.b32.xlu0 %v3072, 127
        %v3088 = vpop.permute.xlu0 %3087
        %v3091 = vpack.i.b16 %v3078, %v3074
        %v3092 = vshrl.u32 %v3074, 16
        %v3093 = vshrl.u32 %v3078, 16
        %v3094 = vpack.i.b16 %v3093, %v3092
        %v3097 = vpack.i.b16 %v3086, %v3082
        %v3098 = vshrl.u32 %v3082, 16
        %v3099 = vshrl.u32 %v3086, 16
        %v3100 = vpack.i.b16 %v3099, %v3098
        %v3103 = vpack.i.b16 %v3080, %v3076
        %v3104 = vshrl.u32 %v3076, 16
        %v3105 = vshrl.u32 %v3080, 16
        %v3106 = vpack.i.b16 %v3105, %v3104
        %v3109 = vpack.i.b16 %v3088, %v3084
        %v3110 = vshrl.u32 %v3084, 16
        %v3111 = vshrl.u32 %v3088, 16
        %v3112 = vpack.i.b16 %v3111, %v3110
        %v3115 = vunpack.c.l.s4 1983009808
        %v3116 = vunpack.c.0.s8 %v3115
        %v3117 = vlaneseq
        %v3118 = vshrl.u32 %v3117, 7
        %v3119 = vsub.s32 %v3116, %v3118
        %v3120 = vrot.slane %v3091, %v3119
        %v3123 = vunpack.c.l.s4 1983009808
        %v3124 = vunpack.c.0.s8 %v3123
        %v3125 = vlaneseq
        %v3126 = vshrl.u32 %v3125, 7
        %v3127 = vsub.s32 %v3124, %v3126
        %v3128 = vrot.slane %v3097, %v3127
        %v3129 = vcombine.low %v3120, %v3128
        %v3130 = vcombine.high %v3120, %v3128
        %v3132 = vunpack.c.l.s4 1934713408
        %v3133 = vunpack.c.0.s8 %v3132
        %v3134 = vlaneseq
        %v3135 = vshrl.u32 %v3134, 7
        %v3136 = vsub.s32 %v3133, %v3135
        %v3137 = vrot.slane %v3129, %v3136
        %v3139 = vunpack.c.l.s4 1934713408
        %v3140 = vunpack.c.0.s8 %v3139
        %v3141 = vlaneseq
        %v3142 = vshrl.u32 %v3141, 7
        %v3143 = vsub.s32 %v3140, %v3142
        %v3144 = vrot.slane %v3130, %v3143
        %v3145 = vcombine.high %v3137, 0
        %v3146 = vcombine.high %v3144, 0
        %v3149 = vunpack.c.l.s4 1983009808
        %v3150 = vunpack.c.0.s8 %v3149
        %v3151 = vlaneseq
        %v3152 = vshrl.u32 %v3151, 7
        %v3153 = vsub.s32 %v3150, %v3152
        %v3154 = vrot.slane %v3094, %v3153
        %v3157 = vunpack.c.l.s4 1983009808
        %v3158 = vunpack.c.0.s8 %v3157
        %v3159 = vlaneseq
        %v3160 = vshrl.u32 %v3159, 7
        %v3161 = vsub.s32 %v3158, %v3160
        %v3162 = vrot.slane %v3100, %v3161
        %v3163 = vcombine.low %v3154, %v3162
        %v3164 = vcombine.high %v3154, %v3162
        %v3166 = vunpack.c.l.s4 1934713408
        %v3167 = vunpack.c.0.s8 %v3166
        %v3168 = vlaneseq
        %v3169 = vshrl.u32 %v3168, 7
        %v3170 = vsub.s32 %v3167, %v3169
        %v3171 = vrot.slane %v3163, %v3170
        %v3173 = vunpack.c.l.s4 1934713408
        %v3174 = vunpack.c.0.s8 %v3173
        %v3175 = vlaneseq
        %v3176 = vshrl.u32 %v3175, 7
        %v3177 = vsub.s32 %v3174, %v3176
        %v3178 = vrot.slane %v3164, %v3177
        %v3179 = vcombine.high %v3171, 0
        %v3180 = vcombine.high %v3178, 0
        %v3183 = vunpack.c.l.s4 1983009808
        %v3184 = vunpack.c.0.s8 %v3183
        %v3185 = vlaneseq
        %v3186 = vshrl.u32 %v3185, 7
        %v3187 = vsub.s32 %v3184, %v3186
        %v3188 = vrot.slane %v3103, %v3187
        %v3191 = vunpack.c.l.s4 1983009808
        %v3192 = vunpack.c.0.s8 %v3191
        %v3193 = vlaneseq
        %v3194 = vshrl.u32 %v3193, 7
        %v3195 = vsub.s32 %v3192, %v3194
        %v3196 = vrot.slane %v3109, %v3195
        %v3197 = vcombine.low %v3188, %v3196
        %v3198 = vcombine.high %v3188, %v3196
        %v3200 = vunpack.c.l.s4 1934713408
        %v3201 = vunpack.c.0.s8 %v3200
        %v3202 = vlaneseq
        %v3203 = vshrl.u32 %v3202, 7
        %v3204 = vsub.s32 %v3201, %v3203
        %v3205 = vrot.slane %v3197, %v3204
        %v3207 = vunpack.c.l.s4 1934713408
        %v3208 = vunpack.c.0.s8 %v3207
        %v3209 = vlaneseq
        %v3210 = vshrl.u32 %v3209, 7
        %v3211 = vsub.s32 %v3208, %v3210
        %v3212 = vrot.slane %v3198, %v3211
        %v3213 = vcombine.high %v3205, 0
        %v3214 = vcombine.high %v3212, 0
        %v3217 = vunpack.c.l.s4 1983009808
        %v3218 = vunpack.c.0.s8 %v3217
        %v3219 = vlaneseq
        %v3220 = vshrl.u32 %v3219, 7
        %v3221 = vsub.s32 %v3218, %v3220
        %v3222 = vrot.slane %v3106, %v3221
        %v3225 = vunpack.c.l.s4 1983009808
        %v3226 = vunpack.c.0.s8 %v3225
        %v3227 = vlaneseq
        %v3228 = vshrl.u32 %v3227, 7
        %v3229 = vsub.s32 %v3226, %v3228
        %v3230 = vrot.slane %v3112, %v3229
        %v3231 = vcombine.low %v3222, %v3230
        %v3232 = vcombine.high %v3222, %v3230
        %v3234 = vunpack.c.l.s4 1934713408
        %v3235 = vunpack.c.0.s8 %v3234
        %v3236 = vlaneseq
        %v3237 = vshrl.u32 %v3236, 7
        %v3238 = vsub.s32 %v3235, %v3237
        %v3239 = vrot.slane %v3231, %v3238
        %v3241 = vunpack.c.l.s4 1934713408
        %v3242 = vunpack.c.0.s8 %v3241
        %v3243 = vlaneseq
        %v3244 = vshrl.u32 %v3243, 7
        %v3245 = vsub.s32 %v3242, %v3244
        %v3246 = vrot.slane %v3232, %v3245
        %v3247 = vcombine.high %v3239, 0
        %v3248 = vcombine.high %v3246, 0
        %v3250 = vunpack.c.l.b16 %v3171
        %v3251 = vpack.c.b16 %v3250, %v3250
        %3252 = vrot.lane.b32.xlu0 %v3251, 16
        %v3253 = vpop.permute.xlu0 %3252
        %v3255 = vunpack.c.l.b16 %v3145
        %v3256 = vpack.c.b16 %v3255, %v3255
        %3257 = vrot.lane.b32.xlu0 %v3256, 32
        %v3258 = vpop.permute.xlu0 %3257
        %v3260 = vunpack.c.l.b16 %v3179
        %v3261 = vpack.c.b16 %v3260, %v3260
        %3262 = vrot.lane.b32.xlu0 %v3261, 48
        %v3263 = vpop.permute.xlu0 %3262
        %v3265 = vunpack.c.l.b16 %v3144
        %v3266 = vpack.c.b16 %v3265, %v3265
        %3267 = vrot.lane.b32.xlu0 %v3266, 64
        %v3268 = vpop.permute.xlu0 %3267
        %v3270 = vunpack.c.l.b16 %v3178
        %v3271 = vpack.c.b16 %v3270, %v3270
        %3272 = vrot.lane.b32.xlu0 %v3271, 80
        %v3273 = vpop.permute.xlu0 %3272
        %v3275 = vunpack.c.l.b16 %v3146
        %v3276 = vpack.c.b16 %v3275, %v3275
        %3277 = vrot.lane.b32.xlu0 %v3276, 96
        %v3278 = vpop.permute.xlu0 %3277
        %v3280 = vunpack.c.l.b16 %v3180
        %v3281 = vpack.c.b16 %v3280, %v3280
        %3282 = vrot.lane.b32.xlu0 %v3281, 112
        %v3283 = vpop.permute.xlu0 %3282
        %v3285 = vunpack.c.l.b16 %v3239
        %v3286 = vpack.c.b16 %v3285, %v3285
        %3287 = vrot.lane.b32.xlu0 %v3286, 16
        %v3288 = vpop.permute.xlu0 %3287
        %v3290 = vunpack.c.l.b16 %v3213
        %v3291 = vpack.c.b16 %v3290, %v3290
        %3292 = vrot.lane.b32.xlu0 %v3291, 32
        %v3293 = vpop.permute.xlu0 %3292
        %v3295 = vunpack.c.l.b16 %v3247
        %v3296 = vpack.c.b16 %v3295, %v3295
        %3297 = vrot.lane.b32.xlu0 %v3296, 48
        %v3298 = vpop.permute.xlu0 %3297
        %v3300 = vunpack.c.l.b16 %v3212
        %v3301 = vpack.c.b16 %v3300, %v3300
        %3302 = vrot.lane.b32.xlu0 %v3301, 64
        %v3303 = vpop.permute.xlu0 %3302
        %v3305 = vunpack.c.l.b16 %v3246
        %v3306 = vpack.c.b16 %v3305, %v3305
        %3307 = vrot.lane.b32.xlu0 %v3306, 80
        %v3308 = vpop.permute.xlu0 %3307
        %v3310 = vunpack.c.l.b16 %v3214
        %v3311 = vpack.c.b16 %v3310, %v3310
        %3312 = vrot.lane.b32.xlu0 %v3311, 96
        %v3313 = vpop.permute.xlu0 %3312
        %v3315 = vunpack.c.l.b16 %v3248
        %v3316 = vpack.c.b16 %v3315, %v3315
        %3317 = vrot.lane.b32.xlu0 %v3316, 112
        %v3318 = vpop.permute.xlu0 %3317
        %v3321 = vsel %vm894, %v3137, %v3253
        %v3323 = vsel %vm898, %v3321, %v3258
        %v3325 = vsel %vm901, %v3323, %v3263
        %v3327 = vsel %vm904, %v3325, %v3268
        %v3329 = vsel %vm907, %v3327, %v3273
        %v3331 = vsel %vm910, %v3329, %v3278
        %v3333 = vsel %vm913, %v3331, %v3283
        %v3336 = vsel %vm894, %v3205, %v3288
        %v3338 = vsel %vm898, %v3336, %v3293
        %v3340 = vsel %vm901, %v3338, %v3298
        %v3342 = vsel %vm904, %v3340, %v3303
        %v3344 = vsel %vm907, %v3342, %v3308
        %v3346 = vsel %vm910, %v3344, %v3313
        %v3348 = vsel %vm913, %v3346, %v3318
        %v3351 = vunpack.c.l.b16 %v3333
        %v3352 = vunpack.c.l.b16 %v3348
        %v3353 = vpack.c.b16 %v3352, %v3351
        %v3354 = vrot.slane %v3353, 6
        %3356 = vst [vmem:[#allocation3 + $0x18] sm:$0xcc] %v3354
        %v3357 = vld [vmem:[#allocation2] sm:$0xe]
        %v3358 = vld [vmem:[#allocation2 + $0x4] sm:$0xf]
        %v3359 = vld [vmem:[#allocation2 + $0x8] sm:$0x1]
        %v3360 = vld [vmem:[#allocation2 + $0xc] sm:$0xe]
        %v3361 = vld [vmem:[#allocation2 + $0x10] sm:$0xf]
        %v3362 = vld [vmem:[#allocation2 + $0x14] sm:$0x1]
        %v3363 = vld [vmem:[#allocation2 + $0x18] sm:$0xe]
        %v3364 = vld [vmem:[#allocation2 + $0x1c] sm:$0xf]
        %v3365 = vld [vmem:[#allocation2 + $0x20] sm:$0x1]
        %v3366 = vld [vmem:[#allocation2 + $0x24] sm:$0xe]
        %v3367 = vld [vmem:[#allocation2 + $0x28] sm:$0xf]
        %v3368 = vld [vmem:[#allocation2 + $0x2c] sm:$0x1]
        %v3381 = vrot.slane %v3357, 5
        %v3382 = vrot.slane %v3381, 4
        %v3383 = vrot.slane %v3358, 5
        %v3384 = vsel %vm2725, %v3382, %v3383
        %v3385 = vrot.slane %v3383, 4
        %v3386 = vrot.slane %v3359, 5
        %v3387 = vsel %vm2725, %v3385, %v3386
        %v3388 = vrot.slane %v3360, 5
        %v3389 = vrot.slane %v3388, 4
        %v3390 = vrot.slane %v3361, 5
        %v3391 = vsel %vm2725, %v3389, %v3390
        %v3392 = vrot.slane %v3390, 4
        %v3393 = vrot.slane %v3362, 5
        %v3394 = vsel %vm2725, %v3392, %v3393
        %v3395 = vrot.slane %v3363, 5
        %v3396 = vrot.slane %v3395, 4
        %v3397 = vrot.slane %v3364, 5
        %v3398 = vsel %vm2725, %v3396, %v3397
        %v3399 = vrot.slane %v3397, 4
        %v3400 = vrot.slane %v3365, 5
        %v3401 = vsel %vm2725, %v3399, %v3400
        %v3402 = vrot.slane %v3366, 5
        %v3403 = vrot.slane %v3402, 4
        %v3404 = vrot.slane %v3367, 5
        %v3405 = vsel %vm2725, %v3403, %v3404
        %v3406 = vrot.slane %v3404, 4
        %v3407 = vrot.slane %v3368, 5
        %v3408 = vsel %vm2725, %v3406, %v3407
        %3409 = vrot.lane.b32.xlu0 %v3384, 126
        %v3410 = vpop.permute.xlu0 %3409
        %3411 = vrot.lane.b32.xlu0 %v3387, 126
        %v3412 = vpop.permute.xlu0 %3411
        %3413 = vrot.lane.b32.xlu0 %v3391, 126
        %v3414 = vpop.permute.xlu0 %3413
        %3415 = vrot.lane.b32.xlu0 %v3394, 126
        %v3416 = vpop.permute.xlu0 %3415
        %3417 = vrot.lane.b32.xlu0 %v3398, 126
        %v3418 = vpop.permute.xlu0 %3417
        %3419 = vrot.lane.b32.xlu0 %v3401, 126
        %v3420 = vpop.permute.xlu0 %3419
        %3421 = vrot.lane.b32.xlu0 %v3405, 126
        %v3422 = vpop.permute.xlu0 %3421
        %3423 = vrot.lane.b32.xlu0 %v3408, 126
        %v3424 = vpop.permute.xlu0 %3423
        %v3427 = vpack.i.b16 %v3414, %v3410
        %v3428 = vshrl.u32 %v3410, 16
        %v3429 = vshrl.u32 %v3414, 16
        %v3430 = vpack.i.b16 %v3429, %v3428
        %v3433 = vpack.i.b16 %v3422, %v3418
        %v3434 = vshrl.u32 %v3418, 16
        %v3435 = vshrl.u32 %v3422, 16
        %v3436 = vpack.i.b16 %v3435, %v3434
        %v3439 = vpack.i.b16 %v3416, %v3412
        %v3440 = vshrl.u32 %v3412, 16
        %v3441 = vshrl.u32 %v3416, 16
        %v3442 = vpack.i.b16 %v3441, %v3440
        %v3445 = vpack.i.b16 %v3424, %v3420
        %v3446 = vshrl.u32 %v3420, 16
        %v3447 = vshrl.u32 %v3424, 16
        %v3448 = vpack.i.b16 %v3447, %v3446
        %v3451 = vunpack.c.l.s4 1983009808
        %v3452 = vunpack.c.0.s8 %v3451
        %v3453 = vlaneseq
        %v3454 = vshrl.u32 %v3453, 7
        %v3455 = vsub.s32 %v3452, %v3454
        %v3456 = vrot.slane %v3427, %v3455
        %v3459 = vunpack.c.l.s4 1983009808
        %v3460 = vunpack.c.0.s8 %v3459
        %v3461 = vlaneseq
        %v3462 = vshrl.u32 %v3461, 7
        %v3463 = vsub.s32 %v3460, %v3462
        %v3464 = vrot.slane %v3433, %v3463
        %v3465 = vcombine.low %v3456, %v3464
        %v3466 = vcombine.high %v3456, %v3464
        %v3468 = vunpack.c.l.s4 1934713408
        %v3469 = vunpack.c.0.s8 %v3468
        %v3470 = vlaneseq
        %v3471 = vshrl.u32 %v3470, 7
        %v3472 = vsub.s32 %v3469, %v3471
        %v3473 = vrot.slane %v3465, %v3472
        %v3475 = vunpack.c.l.s4 1934713408
        %v3476 = vunpack.c.0.s8 %v3475
        %v3477 = vlaneseq
        %v3478 = vshrl.u32 %v3477, 7
        %v3479 = vsub.s32 %v3476, %v3478
        %v3480 = vrot.slane %v3466, %v3479
        %v3481 = vcombine.high %v3473, 0
        %v3482 = vcombine.high %v3480, 0
        %v3485 = vunpack.c.l.s4 1983009808
        %v3486 = vunpack.c.0.s8 %v3485
        %v3487 = vlaneseq
        %v3488 = vshrl.u32 %v3487, 7
        %v3489 = vsub.s32 %v3486, %v3488
        %v3490 = vrot.slane %v3430, %v3489
        %v3493 = vunpack.c.l.s4 1983009808
        %v3494 = vunpack.c.0.s8 %v3493
        %v3495 = vlaneseq
        %v3496 = vshrl.u32 %v3495, 7
        %v3497 = vsub.s32 %v3494, %v3496
        %v3498 = vrot.slane %v3436, %v3497
        %v3499 = vcombine.low %v3490, %v3498
        %v3500 = vcombine.high %v3490, %v3498
        %v3502 = vunpack.c.l.s4 1934713408
        %v3503 = vunpack.c.0.s8 %v3502
        %v3504 = vlaneseq
        %v3505 = vshrl.u32 %v3504, 7
        %v3506 = vsub.s32 %v3503, %v3505
        %v3507 = vrot.slane %v3499, %v3506
        %v3509 = vunpack.c.l.s4 1934713408
        %v3510 = vunpack.c.0.s8 %v3509
        %v3511 = vlaneseq
        %v3512 = vshrl.u32 %v3511, 7
        %v3513 = vsub.s32 %v3510, %v3512
        %v3514 = vrot.slane %v3500, %v3513
        %v3515 = vcombine.high %v3507, 0
        %v3516 = vcombine.high %v3514, 0
        %v3519 = vunpack.c.l.s4 1983009808
        %v3520 = vunpack.c.0.s8 %v3519
        %v3521 = vlaneseq
        %v3522 = vshrl.u32 %v3521, 7
        %v3523 = vsub.s32 %v3520, %v3522
        %v3524 = vrot.slane %v3439, %v3523
        %v3527 = vunpack.c.l.s4 1983009808
        %v3528 = vunpack.c.0.s8 %v3527
        %v3529 = vlaneseq
        %v3530 = vshrl.u32 %v3529, 7
        %v3531 = vsub.s32 %v3528, %v3530
        %v3532 = vrot.slane %v3445, %v3531
        %v3533 = vcombine.low %v3524, %v3532
        %v3534 = vcombine.high %v3524, %v3532
        %v3536 = vunpack.c.l.s4 1934713408
        %v3537 = vunpack.c.0.s8 %v3536
        %v3538 = vlaneseq
        %v3539 = vshrl.u32 %v3538, 7
        %v3540 = vsub.s32 %v3537, %v3539
        %v3541 = vrot.slane %v3533, %v3540
        %v3543 = vunpack.c.l.s4 1934713408
        %v3544 = vunpack.c.0.s8 %v3543
        %v3545 = vlaneseq
        %v3546 = vshrl.u32 %v3545, 7
        %v3547 = vsub.s32 %v3544, %v3546
        %v3548 = vrot.slane %v3534, %v3547
        %v3549 = vcombine.high %v3541, 0
        %v3550 = vcombine.high %v3548, 0
        %v3553 = vunpack.c.l.s4 1983009808
        %v3554 = vunpack.c.0.s8 %v3553
        %v3555 = vlaneseq
        %v3556 = vshrl.u32 %v3555, 7
        %v3557 = vsub.s32 %v3554, %v3556
        %v3558 = vrot.slane %v3442, %v3557
        %v3561 = vunpack.c.l.s4 1983009808
        %v3562 = vunpack.c.0.s8 %v3561
        %v3563 = vlaneseq
        %v3564 = vshrl.u32 %v3563, 7
        %v3565 = vsub.s32 %v3562, %v3564
        %v3566 = vrot.slane %v3448, %v3565
        %v3567 = vcombine.low %v3558, %v3566
        %v3568 = vcombine.high %v3558, %v3566
        %v3570 = vunpack.c.l.s4 1934713408
        %v3571 = vunpack.c.0.s8 %v3570
        %v3572 = vlaneseq
        %v3573 = vshrl.u32 %v3572, 7
        %v3574 = vsub.s32 %v3571, %v3573
        %v3575 = vrot.slane %v3567, %v3574
        %v3577 = vunpack.c.l.s4 1934713408
        %v3578 = vunpack.c.0.s8 %v3577
        %v3579 = vlaneseq
        %v3580 = vshrl.u32 %v3579, 7
        %v3581 = vsub.s32 %v3578, %v3580
        %v3582 = vrot.slane %v3568, %v3581
        %v3583 = vcombine.high %v3575, 0
        %v3584 = vcombine.high %v3582, 0
        %v3586 = vunpack.c.l.b16 %v3507
        %v3587 = vpack.c.b16 %v3586, %v3586
        %3588 = vrot.lane.b32.xlu0 %v3587, 16
        %v3589 = vpop.permute.xlu0 %3588
        %v3591 = vunpack.c.l.b16 %v3481
        %v3592 = vpack.c.b16 %v3591, %v3591
        %3593 = vrot.lane.b32.xlu0 %v3592, 32
        %v3594 = vpop.permute.xlu0 %3593
        %v3596 = vunpack.c.l.b16 %v3515
        %v3597 = vpack.c.b16 %v3596, %v3596
        %3598 = vrot.lane.b32.xlu0 %v3597, 48
        %v3599 = vpop.permute.xlu0 %3598
        %v3601 = vunpack.c.l.b16 %v3480
        %v3602 = vpack.c.b16 %v3601, %v3601
        %3603 = vrot.lane.b32.xlu0 %v3602, 64
        %v3604 = vpop.permute.xlu0 %3603
        %v3606 = vunpack.c.l.b16 %v3514
        %v3607 = vpack.c.b16 %v3606, %v3606
        %3608 = vrot.lane.b32.xlu0 %v3607, 80
        %v3609 = vpop.permute.xlu0 %3608
        %v3611 = vunpack.c.l.b16 %v3482
        %v3612 = vpack.c.b16 %v3611, %v3611
        %3613 = vrot.lane.b32.xlu0 %v3612, 96
        %v3614 = vpop.permute.xlu0 %3613
        %v3616 = vunpack.c.l.b16 %v3516
        %v3617 = vpack.c.b16 %v3616, %v3616
        %3618 = vrot.lane.b32.xlu0 %v3617, 112
        %v3619 = vpop.permute.xlu0 %3618
        %v3621 = vunpack.c.l.b16 %v3575
        %v3622 = vpack.c.b16 %v3621, %v3621
        %3623 = vrot.lane.b32.xlu0 %v3622, 16
        %v3624 = vpop.permute.xlu0 %3623
        %v3626 = vunpack.c.l.b16 %v3549
        %v3627 = vpack.c.b16 %v3626, %v3626
        %3628 = vrot.lane.b32.xlu0 %v3627, 32
        %v3629 = vpop.permute.xlu0 %3628
        %v3631 = vunpack.c.l.b16 %v3583
        %v3632 = vpack.c.b16 %v3631, %v3631
        %3633 = vrot.lane.b32.xlu0 %v3632, 48
        %v3634 = vpop.permute.xlu0 %3633
        %v3636 = vunpack.c.l.b16 %v3548
        %v3637 = vpack.c.b16 %v3636, %v3636
        %3638 = vrot.lane.b32.xlu0 %v3637, 64
        %v3639 = vpop.permute.xlu0 %3638
        %v3641 = vunpack.c.l.b16 %v3582
        %v3642 = vpack.c.b16 %v3641, %v3641
        %3643 = vrot.lane.b32.xlu0 %v3642, 80
        %v3644 = vpop.permute.xlu0 %3643
        %v3646 = vunpack.c.l.b16 %v3550
        %v3647 = vpack.c.b16 %v3646, %v3646
        %3648 = vrot.lane.b32.xlu0 %v3647, 96
        %v3649 = vpop.permute.xlu0 %3648
        %v3651 = vunpack.c.l.b16 %v3584
        %v3652 = vpack.c.b16 %v3651, %v3651
        %3653 = vrot.lane.b32.xlu0 %v3652, 112
        %v3654 = vpop.permute.xlu0 %3653
        %v3657 = vsel %vm894, %v3473, %v3589
        %v3659 = vsel %vm898, %v3657, %v3594
        %v3661 = vsel %vm901, %v3659, %v3599
        %v3663 = vsel %vm904, %v3661, %v3604
        %v3665 = vsel %vm907, %v3663, %v3609
        %v3667 = vsel %vm910, %v3665, %v3614
        %v3669 = vsel %vm913, %v3667, %v3619
        %v3672 = vsel %vm894, %v3541, %v3624
        %v3674 = vsel %vm898, %v3672, %v3629
        %v3676 = vsel %vm901, %v3674, %v3634
        %v3678 = vsel %vm904, %v3676, %v3639
        %v3680 = vsel %vm907, %v3678, %v3644
        %v3682 = vsel %vm910, %v3680, %v3649
        %v3684 = vsel %vm913, %v3682, %v3654
        %v3687 = vunpack.c.l.b16 %v3669
        %v3688 = vunpack.c.l.b16 %v3684
        %v3689 = vpack.c.b16 %v3688, %v3687
        %3691 = vst [vmem:[#allocation3 + $0x20] sm:$0x33] %v3689
        %v3692 = vld [vmem:[%s3] sm:$0x3]
        %v3693 = vld [vmem:[#allocation3] sm:$0xff]
        %v3694 = vld [vmem:[#allocation3 + $0x8] sm:$0xff]
        %v3695 = vld [vmem:[#allocation3 + $0x10] sm:$0xff]
        %v3696 = vld [vmem:[#allocation3 + $0x18] sm:$0xff]
        %v3697 = vld [vmem:[#allocation3 + $0x20] sm:$0x33]
        %v3703 = vunpack.c.l.b16 %v3693
        %v3704 = vunpack.c.h.b16 %v3693
        %v3705 = vunpack.c.l.b16 %v3694
        %v3706 = vunpack.c.h.b16 %v3694
        %v3707 = vunpack.c.l.b16 %v3695
        %v3708 = vunpack.c.h.b16 %v3695
        %v3709 = vunpack.c.l.b16 %v3696
        %v3710 = vunpack.c.h.b16 %v3696
        %v3711 = vunpack.c.l.b16 %v3697
        %v3712 = vunpack.c.h.b16 %v3697
        %v3713 = vpack.c.b16 %v3705, %v3703
        %v3714 = vpack.c.b16 %v3706, %v3704
        %v3715 = vpack.c.b16 %v3709, %v3707
        %v3716 = vpack.c.b16 %v3710, %v3708
        %v3717 = vpack.c.b16 %v3711, %v3711
        %v3718 = vpack.c.b16 %v3712, %v3712
        %vm3723 = vcmask 293888
        %v3725 = vsel %vm3723, %v3692, 0
        %vm3727 = vcmask 1041408
        %v3729 = vsel %vm3727, %v3717, 0
        %v3732 = vsel %vm3727, %v3718, 0
        %3734 = vmatprep.subr.bf16.mxu0 %v3714
        %3735 = vmatpush1.bf16.msra.mxu0 %v3713
        %3736 = vmatprep.subr.bf16.mxu0 %v3716
        %3737 = vmatpush1.bf16.msra.mxu0 %v3715
        %3738 = vmatprep.subr.bf16.mxu0 %v3732
        %3739 = vmatpush1.bf16.msra.mxu0 %v3729
        %3740 = vmatprep.subr.bf16.mxu0 0
        %3741 = vmatpush1.bf16.msra.mxu0 0
        %3742 = vmatprep.subr.bf16.mxu0 0
        %3743 = vmatpush1.bf16.msra.mxu0 0
        %3744 = vmatprep.subr.bf16.mxu0 0
        %3745 = vmatpush1.bf16.msra.mxu0 0
        %3746 = vmatprep.subr.bf16.mxu0 0
        %3747 = vmatpush1.bf16.msra.mxu0 0
        %3748 = vmatprep.subr.bf16.mxu0 0
        %3749 = vmatpush1.bf16.msra.mxu0 0
        %3750 = vmatprep.subr.bf16.mxu0 0
        %3751 = vmatpush1.bf16.msra.mxu0 0
        %3752 = vmatprep.subr.bf16.mxu0 0
        %3753 = vmatpush1.bf16.msra.mxu0 0
        %3754 = vmatprep.subr.bf16.mxu0 0
        %3755 = vmatpush1.bf16.msra.mxu0 0
        %3756 = vmatprep.subr.bf16.mxu0 0
        %3757 = vmatpush1.bf16.msra.mxu0 0
        %3758 = vmatprep.subr.bf16.mxu0 0
        %3759 = vmatpush1.bf16.msra.mxu0 0
        %3760 = vmatprep.subr.bf16.mxu0 0
        %3761 = vmatpush1.bf16.msra.mxu0 0
        %3762 = vmatprep.subr.bf16.mxu0 0
        %3763 = vmatpush1.bf16.msra.mxu0 0
        %3764 = vmatprep.subr.bf16.mxu0 0
        %3765 = vmatpush1.bf16.msra.mxu0 0
        %3766 = vmatprep.mubr.bf16.mxu0 0
        %3767 = vmatmul.mubr.bf16.gmra.mrb[0].mxu0 %v3725
        %v3768 = vpop.f32.mrb[0].mxu0
        %v3769 = vadd.f32 0.0, %v3768
        %v3770 = vpop.f32.mrb[0].mxu0
        %v3771 = vadd.f32 0.0, %v3770
        %v3772 = vpop.f32.mrb[0].mxu0
        %v3773 = vpop.f32.mrb[0].mxu0
        %3774 = vdwg.mxu0
        %v3775 = vmul.f32 %v3769, 2.0
        %v3776 = vmul.f32 %v3771, 2.0
        %v3779 = vcombine.low %v3775, %v3776
        %3781 = vst [vmem:[%s213] sm:$0xff] %v3779
        %s3782 = sand.u32 %s118, 1
        %s3783 = scalar_lea.sflag [#allocation6], %s3782
        %s3784 = sand.u32 %s118, 1
        %s3785 = smul.addr %s3784, 8
        %s3786 = scalar_lea.vmem [#allocation7], %s3785
        // Predicated region
        $region41: #{tpu_custom_call.1} parent=35 // pred_check
          %p3787 = pneg %p128
        $region42: #{tpu_custom_call.1} parent=35 // pred_check_branch
          %3789 = sbr.rel (%p3787) target = $region44
        $region43: #{tpu_custom_call.1} parent=35 // pred_region
          %s3791 = ssub.s32 128, 128
          %3792 = vsyncadd %s3783, %s3791
          %s3793 = smul.addr %s21, 2
          %s3794 = smul.addr %s3793, 64
          %s3795 = scalar_lea.hbm %s4, %s3794
          %s3797 = sshll.u32 %s3786, 4
          %s3798 = int_to_ptr.vmem [resolvable:$true] %s3797
          %3800 = dma.vmem_to_hbm [thread:$0]  %s3798, 128, %s3795, %s3783
        $region44: #{tpu_custom_call.1} parent=35 // pred_fallthru
          _
      $region36: #{tpu_custom_call.1} parent=5 // pred_fallthru
        _
      %p3801 = scmp.le.s32.totalorder 2, %s16
      // Predicated region
      $region45: #{tpu_custom_call.1} parent=5 // pred_check
        %p3802 = pneg %p3801
      $region46: #{tpu_custom_call.1} parent=5 // pred_check_branch
        %3804 = sbr.rel (%p3802) target = $region48
      $region47: #{tpu_custom_call.1} parent=5 // pred_region
        %s3805 = ssub.s32 %s16, 2
        // Predicated region
        $region49: #{tpu_custom_call.1} parent=47 // pred_check
          %p3806 = pneg %p134
        $region50: #{tpu_custom_call.1} parent=47 // pred_check_branch
          %3808 = sbr.rel (%p3806) target = $region52
        $region51: #{tpu_custom_call.1} parent=47 // pred_region
          %s3809 = sand.u32 %s119, 1
          %s3810 = scalar_lea.sflag [#allocation6], %s3809
          %s3811 = sand.u32 %s119, 1
          %s3812 = smul.addr %s3811, 8
          %s3813 = scalar_lea.vmem [#allocation7], %s3812
          %3814 = dma.done %s3810, 128
        $region52: #{tpu_custom_call.1} parent=47 // pred_fallthru
          _
      $region48: #{tpu_custom_call.1} parent=5 // pred_fallthru
        _
    $region6: #{tpu_custom_call.1} parent=1 // loop_footer
      %s20 = sadd.s32 1, %s16
    $region7: #{tpu_custom_call.1} parent=1 // loop_footer_branch
      %15 = sbr.rel target = $region3
    $region8: #{tpu_custom_call.1} parent=1 // loop_exit
      _
    %3815 = vsyncpa [#allocation5], 1
    %s3816 = scalar_lea.sflag [#allocation5], 1
    %3817 = vsyncpa %s3816, 1
    %3818 = vsyncpa [#allocation6], 1
    %s3819 = scalar_lea.sflag [#allocation6], 1
    %3820 = vsyncpa %s3819, 1

</llo_original>
